<compile_context>
chip_gen: v5e
topology: v5e:2x2
jax: 0.10.0
libtpu: 0.0.40
codegen_flags: <defaults>
</compile_context>

<pallas_src>
import jax
import jax.numpy as jnp
from jax.experimental import pallas as pl
from jax.experimental.pallas import tpu as pltpu


def _lstm_kernel(x_ref, wih0_ref, b0_ref, whh0_ref, wih1_ref, whh1_ref,
                 b1_ref, wout_ref, bout_ref, out_ref, xp0_sc, h2_sc):
    """Full 2-layer LSTM recurrence + output projection in one invocation.

    x_ref   : (S*B, I)   input sequence (seq-major, rows t*B .. t*B+B-1)
    wih0_ref: (I, 4H)    layer-0 input weights
    b0_ref  : (1, 4H)    layer-0 bias (b_ih + b_hh)
    whh0_ref: (H, 4H)    layer-0 recurrent weights
    wih1_ref: (H, 4H)    layer-1 input weights
    whh1_ref: (H, 4H)    layer-1 recurrent weights
    b1_ref  : (1, 4H)    layer-1 bias (b_ih + b_hh)
    wout_ref: (1, 1, H)  Linear weight (output_size == 1), lane-major over H
    bout_ref: (1, 1, 1)  Linear bias
    out_ref : (S, B, 1)  output
    xp0_sc  : (S*B, 4H)  VMEM scratch: precomputed x @ W_ih0 + b0
    h2_sc   : (S, B, H)  VMEM scratch: layer-1 hidden states
    """
    S, B, H = h2_sc.shape
    H4 = 4 * H

    # ---- Prologue (off the recurrence's critical path) -------------------
    # Layer-0 input projection for the whole sequence: one (S*B, I) @ (I, 4H)
    # matmul into VMEM scratch.
    xp0_sc[...] = (jnp.dot(x_ref[...], wih0_ref[...],
                           preferred_element_type=jnp.float32) + b0_ref[...])

    # Pack recurrent weights into a single block matrix so the serial per-step
    # MXU chain is one (B, 2H) @ (2H, 8H) matmul (see header comment).
    whh0 = whh0_ref[...]                                            # (H, 4H)
    wih1 = wih1_ref[...]                                            # (H, 4H)
    whh1 = whh1_ref[...]                                            # (H, 4H)
    w_big = jnp.concatenate(
        [jnp.concatenate([whh0, wih1], axis=-1),
         jnp.concatenate([jnp.zeros((H, H4), jnp.float32), whh1], axis=-1)],
        axis=0)                                                     # (2H, 8H)
    b_big = jnp.concatenate(
        [jnp.zeros((1, H4), jnp.float32), b1_ref[...]], axis=-1)    # (1, 8H)

    # Lane mask selecting the tanh ("g") gate lanes of the fused 4H gate
    # vector (PyTorch gate order [i, f, g, o]); hoisted out of the loop.
    lane = jax.lax.broadcasted_iota(jnp.int32, (B, H4), 1)
    g_mask = (lane >= 2 * H) & (lane < 3 * H)
    # sigmoid(x) = 0.5 * (1 + tanh(x/2)): a single EUP transcendental per
    # gate vector instead of tanh + sigmoid.
    act_scale = jnp.where(g_mask, jnp.float32(1.0), jnp.float32(0.5))

    def gates_to_hc(gates, c):
        th = jnp.tanh(gates * act_scale)                 # one EUP push
        act = jnp.where(g_mask, th, 0.5 * th + 0.5)      # tanh / sigmoid
        i = act[:, 0 * H:1 * H]
        f = act[:, 1 * H:2 * H]
        g = act[:, 2 * H:3 * H]
        o = act[:, 3 * H:4 * H]
        c_new = f * c + i * g
        h_new = o * jnp.tanh(c_new)
        return h_new, c_new

    def step(t, carry):
        # r0 = h0_{t-1} @ whh0, produced by the previous step's fused matmul
        # (zero at t=0 because h0_{-1} = 0).
        r0, c0, h1, c1 = carry
        # Layer 0: input projection was precomputed in the prologue.
        h0, c0 = gates_to_hc(xp0_sc[pl.ds(t * B, B), :] + r0, c0)
        # Single fused matmul per step.
        fused = jnp.dot(jnp.concatenate([h0, h1], axis=-1), w_big,
                        preferred_element_type=jnp.float32) + b_big  # (B, 8H)
        r0_new = fused[:, :H4]               # recurrent gates0 part for t+1
        h1, c1 = gates_to_hc(fused[:, H4:], c1)
        h2_sc[t] = h1
        return (r0_new, c0, h1, c1)

    zh = jnp.zeros((B, H), jnp.float32)
    jax.lax.fori_loop(0, S, step,
                      (jnp.zeros((B, H4), jnp.float32), zh, zh, zh),
                      unroll=True)

    # Epilogue: Linear(H -> 1) over all timesteps at once — one elementwise
    # multiply + lane reduction over H, single store of the whole output.
    y = (jnp.sum(h2_sc[...] * wout_ref[...], axis=-1, keepdims=True)
         + bout_ref[...])
    out_ref[...] = y.astype(out_ref.dtype)


def lstm_forward(x, params):
    """x: (S, B, I) float32 -> (S, B, O) float32."""
    S, B, I = x.shape
    H = params["whh0_t"].shape[0]
    O = params["wout_t"].shape[1]
    if O != 1:
        # TODO(synk): generalize the in-kernel epilogue projection to O > 1
        # (the spec module uses output_size=1).
        raise NotImplementedError("kernel epilogue specialized for output_size=1")

    # Free, metadata-only views (no extra device compute in the wrapper).
    x2d = x.reshape(S * B, I)
    wout_row = params["wout_t"].reshape(1, 1, H)   # valid because O == 1
    bout_b = params["bout"].reshape(1, 1, O)

    full = lambda a: pl.BlockSpec(a.shape, lambda t: (0,) * a.ndim)

    grid_spec = pltpu.PrefetchScalarGridSpec(
        num_scalar_prefetch=0,
        grid=(1,),  # whole sequence handled in one kernel invocation
        in_specs=[
            full(x2d),
            full(params["wih0_t"]), full(params["b0"]),
            full(params["whh0_t"]), full(params["wih1_t"]),
            full(params["whh1_t"]), full(params["b1"]),
            full(wout_row), full(bout_b),
        ],
        out_specs=pl.BlockSpec((S, B, O), lambda t: (0, 0, 0)),
        scratch_shapes=[
            pltpu.VMEM((S * B, 4 * H), jnp.float32),  # xp0 (input projection)
            pltpu.VMEM((S, B, H), jnp.float32),       # layer-1 hidden states
        ],
    )

    return pl.pallas_call(
        _lstm_kernel,
        out_shape=jax.ShapeDtypeStruct((S, B, O), jnp.float32),
        grid_spec=grid_spec,
        compiler_params=pltpu.CompilerParams(
            dimension_semantics=("arbitrary",)),
    )(x2d,
      params["wih0_t"], params["b0"],
      params["whh0_t"], params["wih1_t"], params["whh1_t"], params["b1"],
      wout_row, bout_b)


def init_params(key, input_size, hidden_size, output_size):
    """Deterministic PyTorch-style uniform(-1/sqrt(H), 1/sqrt(H)) init."""
    H, I, O = hidden_size, input_size, output_size
    k = 1.0 / jnp.sqrt(jnp.float32(H))
    keys = jax.random.split(key, 12)
    u = lambda kk, shape, b: jax.random.uniform(kk, shape, jnp.float32, -b, b)

    # PyTorch parameter shapes: weight_ih_l0 (4H, I), weight_hh_l0 (4H, H), ...
    w_ih_l0 = u(keys[0], (4 * H, I), k)
    w_hh_l0 = u(keys[1], (4 * H, H), k)
    b_ih_l0 = u(keys[2], (4 * H,), k)
    b_hh_l0 = u(keys[3], (4 * H,), k)
    w_ih_l1 = u(keys[4], (4 * H, H), k)
    w_hh_l1 = u(keys[5], (4 * H, H), k)
    b_ih_l1 = u(keys[6], (4 * H,), k)
    b_hh_l1 = u(keys[7], (4 * H,), k)
    w_out = u(keys[8], (O, H), k)
    b_out = u(keys[9], (O,), k)

    return {
        "wih0_t": w_ih_l0.T,                       # (I, 4H)
        "whh0_t": w_hh_l0.T,                       # (H, 4H)
        "b0": (b_ih_l0 + b_hh_l0)[None, :],        # (1, 4H)
        "wih1_t": w_ih_l1.T,                       # (H, 4H)
        "whh1_t": w_hh_l1.T,                       # (H, 4H)
        "b1": (b_ih_l1 + b_hh_l1)[None, :],        # (1, 4H)
        "wout_t": w_out.T,                         # (H, O)
        "bout": b_out[None, :],                    # (1, O)
    }


def lstm_reference(x, params):
    """Pure-JAX reference (same math as torch.nn.LSTM + Linear)."""
    S, B, I = x.shape
    H = params["whh0_t"].shape[0]

    def cell(x_t, h, c, wih_t, whh_t, b):
        gates = x_t @ wih_t + h @ whh_t + b
        i = jax.nn.sigmoid(gates[:, 0 * H:1 * H])
        f = jax.nn.sigmoid(gates[:, 1 * H:2 * H])
        g = jnp.tanh(gates[:, 2 * H:3 * H])
        o = jax.nn.sigmoid(gates[:, 3 * H:4 * H])
        c = f * c + i * g
        h = o * jnp.tanh(c)
        return h, c

    h0 = jnp.zeros((B, H), jnp.float32)
    c0 = jnp.zeros((B, H), jnp.float32)
    h1 = jnp.zeros((B, H), jnp.float32)
    c1 = jnp.zeros((B, H), jnp.float32)
    outs = []
    for t in range(S):
        h0, c0 = cell(x[t], h0, c0, params["wih0_t"], params["whh0_t"], params["b0"])
        h1, c1 = cell(h0, h1, c1, params["wih1_t"], params["whh1_t"], params["b1"])
        outs.append(h1 @ params["wout_t"] + params["bout"])
    return jnp.stack(outs, axis=0)


if __name__ == "__main__":
    SEQ, BATCH = 8, 2
    INPUT_SIZE, HIDDEN_SIZE, OUTPUT_SIZE = 4, 32, 1

    key = jax.random.PRNGKey(0)
    kx, kp = jax.random.split(key)
    x = jax.random.normal(kx, (SEQ, BATCH, INPUT_SIZE), jnp.float32)
    params = init_params(kp, INPUT_SIZE, HIDDEN_SIZE, OUTPUT_SIZE)

    y = jax.block_until_ready(jax.jit(lstm_forward)(x, params))

    y_ref = lstm_reference(x, params)
    assert y.shape == (SEQ, BATCH, OUTPUT_SIZE)
    assert jnp.allclose(y, y_ref, atol=1e-5, rtol=1e-5), "mismatch vs reference"

    print("KERNEL_OK")
</pallas_src>

<mosaic_0001>
module attributes {stable_mosaic.version = 11 : i64} {
  func.func @_lstm_kernel(%arg0: i32, %arg1: memref<16x4xf32, #tpu.memory_space<vmem>>, %arg2: memref<4x128xf32, #tpu.memory_space<vmem>>, %arg3: memref<1x128xf32, #tpu.memory_space<vmem>>, %arg4: memref<32x128xf32, #tpu.memory_space<vmem>>, %arg5: memref<32x128xf32, #tpu.memory_space<vmem>>, %arg6: memref<32x128xf32, #tpu.memory_space<vmem>>, %arg7: memref<1x128xf32, #tpu.memory_space<vmem>>, %arg8: memref<1x1x32xf32, #tpu.memory_space<vmem>>, %arg9: memref<1x1x1xf32, #tpu.memory_space<vmem>>, %arg10: memref<8x2x1xf32, #tpu.memory_space<vmem>>, %arg11: memref<16x128xf32, #tpu.memory_space<vmem>>, %arg12: memref<8x2x32xf32, #tpu.memory_space<vmem>>) attributes {dimension_semantics = [#tpu.dimension_semantics<arbitrary>], iteration_bounds = array<i64: 1>, scalar_prefetch = 0 : i64, scratch_operands = 2 : i64, tpu.core_type = #tpu.core_type<tc>, window_params = [{pipeline_mode = #tpu.pipeline_mode<synchronous>, transform_indices = @transform_0, window_bounds = array<i64: 16, 4>}, {pipeline_mode = #tpu.pipeline_mode<synchronous>, transform_indices = @transform_1, window_bounds = array<i64: 4, 128>}, {pipeline_mode = #tpu.pipeline_mode<synchronous>, transform_indices = @transform_2, window_bounds = array<i64: 1, 128>}, {pipeline_mode = #tpu.pipeline_mode<synchronous>, transform_indices = @transform_3, window_bounds = array<i64: 32, 128>}, {pipeline_mode = #tpu.pipeline_mode<synchronous>, transform_indices = @transform_4, window_bounds = array<i64: 32, 128>}, {pipeline_mode = #tpu.pipeline_mode<synchronous>, transform_indices = @transform_5, window_bounds = array<i64: 32, 128>}, {pipeline_mode = #tpu.pipeline_mode<synchronous>, transform_indices = @transform_6, window_bounds = array<i64: 1, 128>}, {pipeline_mode = #tpu.pipeline_mode<synchronous>, transform_indices = @transform_7, window_bounds = array<i64: 1, 1, 32>}, {pipeline_mode = #tpu.pipeline_mode<synchronous>, transform_indices = @transform_8, window_bounds = array<i64: 1, 1, 1>}, {pipeline_mode = #tpu.pipeline_mode<synchronous>, transform_indices = @transform_9, window_bounds = array<i64: 8, 2, 1>}]} {
    %c0 = arith.constant 0 : index
    %c0_0 = arith.constant 0 : index
    %0 = vector.load %arg1[%c0, %c0_0] : memref<16x4xf32, #tpu.memory_space<vmem>>, vector<16x4xf32>
    %c0_1 = arith.constant 0 : index
    %c0_2 = arith.constant 0 : index
    %1 = vector.load %arg2[%c0_1, %c0_2] : memref<4x128xf32, #tpu.memory_space<vmem>>, vector<4x128xf32>
    %cst = arith.constant dense<0.000000e+00> : vector<16x128xf32>
    %2 = tpu.matmul %0, %1, %cst {dimension_numbers = #tpu.dot_dimension_numbers<[1], [0], [0], [1], [0, 0, 1, 1], [], []>} : vector<16x4xf32>, vector<4x128xf32>, vector<16x128xf32> -> vector<16x128xf32>
    %c0_3 = arith.constant 0 : index
    %c0_4 = arith.constant 0 : index
    %3 = vector.load %arg3[%c0_3, %c0_4] : memref<1x128xf32, #tpu.memory_space<vmem>>, vector<1x128xf32>
    %4 = vector.broadcast %3 : vector<1x128xf32> to vector<16x128xf32>
    %5 = arith.addf %2, %4 : vector<16x128xf32>
    %c0_5 = arith.constant 0 : index
    %c0_6 = arith.constant 0 : index
    %6 = vector.load %arg11[%c0_5, %c0_6] : memref<16x128xf32, #tpu.memory_space<vmem>>, vector<16x128xf32>
    tpu.vector_store %arg11[%c0_5, %c0_6], %5 {strides = array<i32>} : memref<16x128xf32, #tpu.memory_space<vmem>>, vector<16x128xf32>,
    %c0_7 = arith.constant 0 : index
    %c0_8 = arith.constant 0 : index
    %7 = vector.load %arg4[%c0_7, %c0_8] : memref<32x128xf32, #tpu.memory_space<vmem>>, vector<32x128xf32>
    %c0_9 = arith.constant 0 : index
    %c0_10 = arith.constant 0 : index
    %8 = vector.load %arg5[%c0_9, %c0_10] : memref<32x128xf32, #tpu.memory_space<vmem>>, vector<32x128xf32>
    %c0_11 = arith.constant 0 : index
    %c0_12 = arith.constant 0 : index
    %9 = vector.load %arg6[%c0_11, %c0_12] : memref<32x128xf32, #tpu.memory_space<vmem>>, vector<32x128xf32>
    %10 = tpu.concatenate %7, %8 in 1 : vector<32x128xf32>, vector<32x128xf32> -> vector<32x256xf32>
    %cst_13 = arith.constant 0.000000e+00 : f32
    %11 = vector.broadcast %cst_13 : f32 to vector<32x128xf32>
    %12 = tpu.concatenate %11, %9 in 1 : vector<32x128xf32>, vector<32x128xf32> -> vector<32x256xf32>
    %13 = tpu.concatenate %10, %12 in 0 : vector<32x256xf32>, vector<32x256xf32> -> vector<64x256xf32>
    %cst_14 = arith.constant 0.000000e+00 : f32
    %14 = vector.broadcast %cst_14 : f32 to vector<1x128xf32>
    %c0_15 = arith.constant 0 : index
    %c0_16 = arith.constant 0 : index
    %15 = vector.load %arg7[%c0_15, %c0_16] : memref<1x128xf32, #tpu.memory_space<vmem>>, vector<1x128xf32>
    %16 = tpu.concatenate %14, %15 in 1 : vector<1x128xf32>, vector<1x128xf32> -> vector<1x256xf32>
    %17 = tpu.iota {dimensions = array<i32: 1>} : vector<2x128xi32>
    %c64_i32 = arith.constant 64 : i32
    %18 = vector.broadcast %c64_i32 : i32 to vector<2x128xi32>
    %19 = arith.cmpi sge, %17, %18 : vector<2x128xi32>
    %c96_i32 = arith.constant 96 : i32
    %20 = vector.broadcast %c96_i32 : i32 to vector<2x128xi32>
    %21 = arith.cmpi slt, %17, %20 : vector<2x128xi32>
    %22 = arith.andi %19, %21 : vector<2x128xi1>
    %cst_17 = arith.constant 1.000000e+00 : f32
    %cst_18 = arith.constant 5.000000e-01 : f32
    %23 = vector.broadcast %cst_17 : f32 to vector<2x128xf32>
    %24 = vector.broadcast %cst_18 : f32 to vector<2x128xf32>
    %25 = arith.select %22, %23, %24 : vector<2x128xi1>, vector<2x128xf32>
    %cst_19 = arith.constant 0.000000e+00 : f32
    %26 = vector.broadcast %cst_19 : f32 to vector<2x32xf32>
    %cst_20 = arith.constant 0.000000e+00 : f32
    %27 = vector.broadcast %cst_20 : f32 to vector<2x128xf32>
    %c0_i32 = arith.constant 0 : i32
    %c2_i32 = arith.constant 2 : i32
    %28 = arith.muli %c0_i32, %c2_i32 : i32
    %29 = arith.index_cast %28 : i32 to index
    %c0_21 = arith.constant 0 : index
    %30 = vector.load %arg11[%29, %c0_21] : memref<16x128xf32, #tpu.memory_space<vmem>>, vector<2x128xf32>
    %31 = arith.addf %30, %27 : vector<2x128xf32>
    %32 = arith.mulf %31, %25 : vector<2x128xf32>
    %33 = math.tanh %32 : vector<2x128xf32>
    %cst_22 = arith.constant 5.000000e-01 : f32
    %34 = vector.broadcast %cst_22 : f32 to vector<2x128xf32>
    %35 = arith.mulf %34, %33 : vector<2x128xf32>
    %cst_23 = arith.constant 5.000000e-01 : f32
    %36 = vector.broadcast %cst_23 : f32 to vector<2x128xf32>
    %37 = arith.addf %35, %36 : vector<2x128xf32>
    %38 = arith.select %22, %33, %37 : vector<2x128xi1>, vector<2x128xf32>
    %39 = vector.extract_strided_slice %38 {offsets = [0, 0], sizes = [2, 32], strides = [1, 1]} : vector<2x128xf32> to vector<2x32xf32>
    %40 = vector.extract_strided_slice %38 {offsets = [0, 32], sizes = [2, 32], strides = [1, 1]} : vector<2x128xf32> to vector<2x32xf32>
    %41 = vector.extract_strided_slice %38 {offsets = [0, 64], sizes = [2, 32], strides = [1, 1]} : vector<2x128xf32> to vector<2x32xf32>
    %42 = vector.extract_strided_slice %38 {offsets = [0, 96], sizes = [2, 32], strides = [1, 1]} : vector<2x128xf32> to vector<2x32xf32>
    %43 = arith.mulf %40, %26 : vector<2x32xf32>
    %44 = arith.mulf %39, %41 : vector<2x32xf32>
    %45 = arith.addf %43, %44 : vector<2x32xf32>
    %46 = math.tanh %45 : vector<2x32xf32>
    %47 = arith.mulf %42, %46 : vector<2x32xf32>
    %48 = tpu.concatenate %47, %26 in 1 : vector<2x32xf32>, vector<2x32xf32> -> vector<2x64xf32>
    %cst_24 = arith.constant dense<0.000000e+00> : vector<2x256xf32>
    %49 = tpu.matmul %48, %13, %cst_24 {dimension_numbers = #tpu.dot_dimension_numbers<[1], [0], [0], [1], [0, 0, 1, 1], [], []>} : vector<2x64xf32>, vector<64x256xf32>, vector<2x256xf32> -> vector<2x256xf32>
    %50 = vector.broadcast %16 : vector<1x256xf32> to vector<2x256xf32>
    %51 = arith.addf %49, %50 : vector<2x256xf32>
    %52 = vector.extract_strided_slice %51 {offsets = [0, 0], sizes = [2, 128], strides = [1, 1]} : vector<2x256xf32> to vector<2x128xf32>
    %53 = vector.extract_strided_slice %51 {offsets = [0, 128], sizes = [2, 128], strides = [1, 1]} : vector<2x256xf32> to vector<2x128xf32>
    %54 = arith.mulf %53, %25 : vector<2x128xf32>
    %55 = math.tanh %54 : vector<2x128xf32>
    %cst_25 = arith.constant 5.000000e-01 : f32
    %56 = vector.broadcast %cst_25 : f32 to vector<2x128xf32>
    %57 = arith.mulf %56, %55 : vector<2x128xf32>
    %cst_26 = arith.constant 5.000000e-01 : f32
    %58 = vector.broadcast %cst_26 : f32 to vector<2x128xf32>
    %59 = arith.addf %57, %58 : vector<2x128xf32>
    %60 = arith.select %22, %55, %59 : vector<2x128xi1>, vector<2x128xf32>
    %61 = vector.extract_strided_slice %60 {offsets = [0, 0], sizes = [2, 32], strides = [1, 1]} : vector<2x128xf32> to vector<2x32xf32>
    %62 = vector.extract_strided_slice %60 {offsets = [0, 32], sizes = [2, 32], strides = [1, 1]} : vector<2x128xf32> to vector<2x32xf32>
    %63 = vector.extract_strided_slice %60 {offsets = [0, 64], sizes = [2, 32], strides = [1, 1]} : vector<2x128xf32> to vector<2x32xf32>
    %64 = vector.extract_strided_slice %60 {offsets = [0, 96], sizes = [2, 32], strides = [1, 1]} : vector<2x128xf32> to vector<2x32xf32>
    %65 = arith.mulf %62, %26 : vector<2x32xf32>
    %66 = arith.mulf %61, %63 : vector<2x32xf32>
    %67 = arith.addf %65, %66 : vector<2x32xf32>
    %68 = math.tanh %67 : vector<2x32xf32>
    %69 = arith.mulf %64, %68 : vector<2x32xf32>
    %70 = arith.index_cast %c0_i32 : i32 to index
    %c0_27 = arith.constant 0 : index
    %c0_28 = arith.constant 0 : index
    %71 = vector.load %arg12[%70, %c0_27, %c0_28] : memref<8x2x32xf32, #tpu.memory_space<vmem>>, vector<1x2x32xf32>
    %72 = vector.shape_cast %71 : vector<1x2x32xf32> to vector<2x32xf32>
    %73 = vector.shape_cast %69 : vector<2x32xf32> to vector<1x2x32xf32>
    tpu.vector_store %arg12[%70, %c0_27, %c0_28], %73 {strides = array<i32>} : memref<8x2x32xf32, #tpu.memory_space<vmem>>, vector<1x2x32xf32>,
    %c1_i32 = arith.constant 1 : i32
    %c2_i32_29 = arith.constant 2 : i32
    %74 = arith.muli %c1_i32, %c2_i32_29 : i32
    %75 = arith.index_cast %74 : i32 to index
    %c0_30 = arith.constant 0 : index
    %76 = vector.load %arg11[%75, %c0_30] : memref<16x128xf32, #tpu.memory_space<vmem>>, vector<2x128xf32>
    %77 = arith.addf %76, %52 : vector<2x128xf32>
    %78 = arith.mulf %77, %25 : vector<2x128xf32>
    %79 = math.tanh %78 : vector<2x128xf32>
    %cst_31 = arith.constant 5.000000e-01 : f32
    %80 = vector.broadcast %cst_31 : f32 to vector<2x128xf32>
    %81 = arith.mulf %80, %79 : vector<2x128xf32>
    %cst_32 = arith.constant 5.000000e-01 : f32
    %82 = vector.broadcast %cst_32 : f32 to vector<2x128xf32>
    %83 = arith.addf %81, %82 : vector<2x128xf32>
    %84 = arith.select %22, %79, %83 : vector<2x128xi1>, vector<2x128xf32>
    %85 = vector.extract_strided_slice %84 {offsets = [0, 0], sizes = [2, 32], strides = [1, 1]} : vector<2x128xf32> to vector<2x32xf32>
    %86 = vector.extract_strided_slice %84 {offsets = [0, 32], sizes = [2, 32], strides = [1, 1]} : vector<2x128xf32> to vector<2x32xf32>
    %87 = vector.extract_strided_slice %84 {offsets = [0, 64], sizes = [2, 32], strides = [1, 1]} : vector<2x128xf32> to vector<2x32xf32>
    %88 = vector.extract_strided_slice %84 {offsets = [0, 96], sizes = [2, 32], strides = [1, 1]} : vector<2x128xf32> to vector<2x32xf32>
    %89 = arith.mulf %86, %45 : vector<2x32xf32>
    %90 = arith.mulf %85, %87 : vector<2x32xf32>
    %91 = arith.addf %89, %90 : vector<2x32xf32>
    %92 = math.tanh %91 : vector<2x32xf32>
    %93 = arith.mulf %88, %92 : vector<2x32xf32>
    %94 = tpu.concatenate %93, %69 in 1 : vector<2x32xf32>, vector<2x32xf32> -> vector<2x64xf32>
    %cst_33 = arith.constant dense<0.000000e+00> : vector<2x256xf32>
    %95 = tpu.matmul %94, %13, %cst_33 {dimension_numbers = #tpu.dot_dimension_numbers<[1], [0], [0], [1], [0, 0, 1, 1], [], []>} : vector<2x64xf32>, vector<64x256xf32>, vector<2x256xf32> -> vector<2x256xf32>
    %96 = vector.broadcast %16 : vector<1x256xf32> to vector<2x256xf32>
    %97 = arith.addf %95, %96 : vector<2x256xf32>
    %98 = vector.extract_strided_slice %97 {offsets = [0, 0], sizes = [2, 128], strides = [1, 1]} : vector<2x256xf32> to vector<2x128xf32>
    %99 = vector.extract_strided_slice %97 {offsets = [0, 128], sizes = [2, 128], strides = [1, 1]} : vector<2x256xf32> to vector<2x128xf32>
    %100 = arith.mulf %99, %25 : vector<2x128xf32>
    %101 = math.tanh %100 : vector<2x128xf32>
    %cst_34 = arith.constant 5.000000e-01 : f32
    %102 = vector.broadcast %cst_34 : f32 to vector<2x128xf32>
    %103 = arith.mulf %102, %101 : vector<2x128xf32>
    %cst_35 = arith.constant 5.000000e-01 : f32
    %104 = vector.broadcast %cst_35 : f32 to vector<2x128xf32>
    %105 = arith.addf %103, %104 : vector<2x128xf32>
    %106 = arith.select %22, %101, %105 : vector<2x128xi1>, vector<2x128xf32>
    %107 = vector.extract_strided_slice %106 {offsets = [0, 0], sizes = [2, 32], strides = [1, 1]} : vector<2x128xf32> to vector<2x32xf32>
    %108 = vector.extract_strided_slice %106 {offsets = [0, 32], sizes = [2, 32], strides = [1, 1]} : vector<2x128xf32> to vector<2x32xf32>
    %109 = vector.extract_strided_slice %106 {offsets = [0, 64], sizes = [2, 32], strides = [1, 1]} : vector<2x128xf32> to vector<2x32xf32>
    %110 = vector.extract_strided_slice %106 {offsets = [0, 96], sizes = [2, 32], strides = [1, 1]} : vector<2x128xf32> to vector<2x32xf32>
    %111 = arith.mulf %108, %67 : vector<2x32xf32>
    %112 = arith.mulf %107, %109 : vector<2x32xf32>
    %113 = arith.addf %111, %112 : vector<2x32xf32>
    %114 = math.tanh %113 : vector<2x32xf32>
    %115 = arith.mulf %110, %114 : vector<2x32xf32>
    %116 = arith.index_cast %c1_i32 : i32 to index
    %c0_36 = arith.constant 0 : index
    %c0_37 = arith.constant 0 : index
    %117 = vector.load %arg12[%116, %c0_36, %c0_37] : memref<8x2x32xf32, #tpu.memory_space<vmem>>, vector<1x2x32xf32>
    %118 = vector.shape_cast %117 : vector<1x2x32xf32> to vector<2x32xf32>
    %119 = vector.shape_cast %115 : vector<2x32xf32> to vector<1x2x32xf32>
    tpu.vector_store %arg12[%116, %c0_36, %c0_37], %119 {strides = array<i32>} : memref<8x2x32xf32, #tpu.memory_space<vmem>>, vector<1x2x32xf32>,
    %c2_i32_38 = arith.constant 2 : i32
    %c2_i32_39 = arith.constant 2 : i32
    %120 = arith.muli %c2_i32_38, %c2_i32_39 : i32
    %121 = arith.index_cast %120 : i32 to index
    %c0_40 = arith.constant 0 : index
    %122 = vector.load %arg11[%121, %c0_40] : memref<16x128xf32, #tpu.memory_space<vmem>>, vector<2x128xf32>
    %123 = arith.addf %122, %98 : vector<2x128xf32>
    %124 = arith.mulf %123, %25 : vector<2x128xf32>
    %125 = math.tanh %124 : vector<2x128xf32>
    %cst_41 = arith.constant 5.000000e-01 : f32
    %126 = vector.broadcast %cst_41 : f32 to vector<2x128xf32>
    %127 = arith.mulf %126, %125 : vector<2x128xf32>
    %cst_42 = arith.constant 5.000000e-01 : f32
    %128 = vector.broadcast %cst_42 : f32 to vector<2x128xf32>
    %129 = arith.addf %127, %128 : vector<2x128xf32>
    %130 = arith.select %22, %125, %129 : vector<2x128xi1>, vector<2x128xf32>
    %131 = vector.extract_strided_slice %130 {offsets = [0, 0], sizes = [2, 32], strides = [1, 1]} : vector<2x128xf32> to vector<2x32xf32>
    %132 = vector.extract_strided_slice %130 {offsets = [0, 32], sizes = [2, 32], strides = [1, 1]} : vector<2x128xf32> to vector<2x32xf32>
    %133 = vector.extract_strided_slice %130 {offsets = [0, 64], sizes = [2, 32], strides = [1, 1]} : vector<2x128xf32> to vector<2x32xf32>
    %134 = vector.extract_strided_slice %130 {offsets = [0, 96], sizes = [2, 32], strides = [1, 1]} : vector<2x128xf32> to vector<2x32xf32>
    %135 = arith.mulf %132, %91 : vector<2x32xf32>
    %136 = arith.mulf %131, %133 : vector<2x32xf32>
    %137 = arith.addf %135, %136 : vector<2x32xf32>
    %138 = math.tanh %137 : vector<2x32xf32>
    %139 = arith.mulf %134, %138 : vector<2x32xf32>
    %140 = tpu.concatenate %139, %115 in 1 : vector<2x32xf32>, vector<2x32xf32> -> vector<2x64xf32>
    %cst_43 = arith.constant dense<0.000000e+00> : vector<2x256xf32>
    %141 = tpu.matmul %140, %13, %cst_43 {dimension_numbers = #tpu.dot_dimension_numbers<[1], [0], [0], [1], [0, 0, 1, 1], [], []>} : vector<2x64xf32>, vector<64x256xf32>, vector<2x256xf32> -> vector<2x256xf32>
    %142 = vector.broadcast %16 : vector<1x256xf32> to vector<2x256xf32>
    %143 = arith.addf %141, %142 : vector<2x256xf32>
    %144 = vector.extract_strided_slice %143 {offsets = [0, 0], sizes = [2, 128], strides = [1, 1]} : vector<2x256xf32> to vector<2x128xf32>
    %145 = vector.extract_strided_slice %143 {offsets = [0, 128], sizes = [2, 128], strides = [1, 1]} : vector<2x256xf32> to vector<2x128xf32>
    %146 = arith.mulf %145, %25 : vector<2x128xf32>
    %147 = math.tanh %146 : vector<2x128xf32>
    %cst_44 = arith.constant 5.000000e-01 : f32
    %148 = vector.broadcast %cst_44 : f32 to vector<2x128xf32>
    %149 = arith.mulf %148, %147 : vector<2x128xf32>
    %cst_45 = arith.constant 5.000000e-01 : f32
    %150 = vector.broadcast %cst_45 : f32 to vector<2x128xf32>
    %151 = arith.addf %149, %150 : vector<2x128xf32>
    %152 = arith.select %22, %147, %151 : vector<2x128xi1>, vector<2x128xf32>
    %153 = vector.extract_strided_slice %152 {offsets = [0, 0], sizes = [2, 32], strides = [1, 1]} : vector<2x128xf32> to vector<2x32xf32>
    %154 = vector.extract_strided_slice %152 {offsets = [0, 32], sizes = [2, 32], strides = [1, 1]} : vector<2x128xf32> to vector<2x32xf32>
    %155 = vector.extract_strided_slice %152 {offsets = [0, 64], sizes = [2, 32], strides = [1, 1]} : vector<2x128xf32> to vector<2x32xf32>
    %156 = vector.extract_strided_slice %152 {offsets = [0, 96], sizes = [2, 32], strides = [1, 1]} : vector<2x128xf32> to vector<2x32xf32>
    %157 = arith.mulf %154, %113 : vector<2x32xf32>
    %158 = arith.mulf %153, %155 : vector<2x32xf32>
    %159 = arith.addf %157, %158 : vector<2x32xf32>
    %160 = math.tanh %159 : vector<2x32xf32>
    %161 = arith.mulf %156, %160 : vector<2x32xf32>
    %162 = arith.index_cast %c2_i32_38 : i32 to index
    %c0_46 = arith.constant 0 : index
    %c0_47 = arith.constant 0 : index
    %163 = vector.load %arg12[%162, %c0_46, %c0_47] : memref<8x2x32xf32, #tpu.memory_space<vmem>>, vector<1x2x32xf32>
    %164 = vector.shape_cast %163 : vector<1x2x32xf32> to vector<2x32xf32>
    %165 = vector.shape_cast %161 : vector<2x32xf32> to vector<1x2x32xf32>
    tpu.vector_store %arg12[%162, %c0_46, %c0_47], %165 {strides = array<i32>} : memref<8x2x32xf32, #tpu.memory_space<vmem>>, vector<1x2x32xf32>,
    %c3_i32 = arith.constant 3 : i32
    %c2_i32_48 = arith.constant 2 : i32
    %166 = arith.muli %c3_i32, %c2_i32_48 : i32
    %167 = arith.index_cast %166 : i32 to index
    %c0_49 = arith.constant 0 : index
    %168 = vector.load %arg11[%167, %c0_49] : memref<16x128xf32, #tpu.memory_space<vmem>>, vector<2x128xf32>
    %169 = arith.addf %168, %144 : vector<2x128xf32>
    %170 = arith.mulf %169, %25 : vector<2x128xf32>
    %171 = math.tanh %170 : vector<2x128xf32>
    %cst_50 = arith.constant 5.000000e-01 : f32
    %172 = vector.broadcast %cst_50 : f32 to vector<2x128xf32>
    %173 = arith.mulf %172, %171 : vector<2x128xf32>
    %cst_51 = arith.constant 5.000000e-01 : f32
    %174 = vector.broadcast %cst_51 : f32 to vector<2x128xf32>
    %175 = arith.addf %173, %174 : vector<2x128xf32>
    %176 = arith.select %22, %171, %175 : vector<2x128xi1>, vector<2x128xf32>
    %177 = vector.extract_strided_slice %176 {offsets = [0, 0], sizes = [2, 32], strides = [1, 1]} : vector<2x128xf32> to vector<2x32xf32>
    %178 = vector.extract_strided_slice %176 {offsets = [0, 32], sizes = [2, 32], strides = [1, 1]} : vector<2x128xf32> to vector<2x32xf32>
    %179 = vector.extract_strided_slice %176 {offsets = [0, 64], sizes = [2, 32], strides = [1, 1]} : vector<2x128xf32> to vector<2x32xf32>
    %180 = vector.extract_strided_slice %176 {offsets = [0, 96], sizes = [2, 32], strides = [1, 1]} : vector<2x128xf32> to vector<2x32xf32>
    %181 = arith.mulf %178, %137 : vector<2x32xf32>
    %182 = arith.mulf %177, %179 : vector<2x32xf32>
    %183 = arith.addf %181, %182 : vector<2x32xf32>
    %184 = math.tanh %183 : vector<2x32xf32>
    %185 = arith.mulf %180, %184 : vector<2x32xf32>
    %186 = tpu.concatenate %185, %161 in 1 : vector<2x32xf32>, vector<2x32xf32> -> vector<2x64xf32>
    %cst_52 = arith.constant dense<0.000000e+00> : vector<2x256xf32>
    %187 = tpu.matmul %186, %13, %cst_52 {dimension_numbers = #tpu.dot_dimension_numbers<[1], [0], [0], [1], [0, 0, 1, 1], [], []>} : vector<2x64xf32>, vector<64x256xf32>, vector<2x256xf32> -> vector<2x256xf32>
    %188 = vector.broadcast %16 : vector<1x256xf32> to vector<2x256xf32>
    %189 = arith.addf %187, %188 : vector<2x256xf32>
    %190 = vector.extract_strided_slice %189 {offsets = [0, 0], sizes = [2, 128], strides = [1, 1]} : vector<2x256xf32> to vector<2x128xf32>
    %191 = vector.extract_strided_slice %189 {offsets = [0, 128], sizes = [2, 128], strides = [1, 1]} : vector<2x256xf32> to vector<2x128xf32>
    %192 = arith.mulf %191, %25 : vector<2x128xf32>
    %193 = math.tanh %192 : vector<2x128xf32>
    %cst_53 = arith.constant 5.000000e-01 : f32
    %194 = vector.broadcast %cst_53 : f32 to vector<2x128xf32>
    %195 = arith.mulf %194, %193 : vector<2x128xf32>
    %cst_54 = arith.constant 5.000000e-01 : f32
    %196 = vector.broadcast %cst_54 : f32 to vector<2x128xf32>
    %197 = arith.addf %195, %196 : vector<2x128xf32>
    %198 = arith.select %22, %193, %197 : vector<2x128xi1>, vector<2x128xf32>
    %199 = vector.extract_strided_slice %198 {offsets = [0, 0], sizes = [2, 32], strides = [1, 1]} : vector<2x128xf32> to vector<2x32xf32>
    %200 = vector.extract_strided_slice %198 {offsets = [0, 32], sizes = [2, 32], strides = [1, 1]} : vector<2x128xf32> to vector<2x32xf32>
    %201 = vector.extract_strided_slice %198 {offsets = [0, 64], sizes = [2, 32], strides = [1, 1]} : vector<2x128xf32> to vector<2x32xf32>
    %202 = vector.extract_strided_slice %198 {offsets = [0, 96], sizes = [2, 32], strides = [1, 1]} : vector<2x128xf32> to vector<2x32xf32>
    %203 = arith.mulf %200, %159 : vector<2x32xf32>
    %204 = arith.mulf %199, %201 : vector<2x32xf32>
    %205 = arith.addf %203, %204 : vector<2x32xf32>
    %206 = math.tanh %205 : vector<2x32xf32>
    %207 = arith.mulf %202, %206 : vector<2x32xf32>
    %208 = arith.index_cast %c3_i32 : i32 to index
    %c0_55 = arith.constant 0 : index
    %c0_56 = arith.constant 0 : index
    %209 = vector.load %arg12[%208, %c0_55, %c0_56] : memref<8x2x32xf32, #tpu.memory_space<vmem>>, vector<1x2x32xf32>
    %210 = vector.shape_cast %209 : vector<1x2x32xf32> to vector<2x32xf32>
    %211 = vector.shape_cast %207 : vector<2x32xf32> to vector<1x2x32xf32>
    tpu.vector_store %arg12[%208, %c0_55, %c0_56], %211 {strides = array<i32>} : memref<8x2x32xf32, #tpu.memory_space<vmem>>, vector<1x2x32xf32>,
    %c4_i32 = arith.constant 4 : i32
    %c2_i32_57 = arith.constant 2 : i32
    %212 = arith.muli %c4_i32, %c2_i32_57 : i32
    %213 = arith.index_cast %212 : i32 to index
    %c0_58 = arith.constant 0 : index
    %214 = vector.load %arg11[%213, %c0_58] : memref<16x128xf32, #tpu.memory_space<vmem>>, vector<2x128xf32>
    %215 = arith.addf %214, %190 : vector<2x128xf32>
    %216 = arith.mulf %215, %25 : vector<2x128xf32>
    %217 = math.tanh %216 : vector<2x128xf32>
    %cst_59 = arith.constant 5.000000e-01 : f32
    %218 = vector.broadcast %cst_59 : f32 to vector<2x128xf32>
    %219 = arith.mulf %218, %217 : vector<2x128xf32>
    %cst_60 = arith.constant 5.000000e-01 : f32
    %220 = vector.broadcast %cst_60 : f32 to vector<2x128xf32>
    %221 = arith.addf %219, %220 : vector<2x128xf32>
    %222 = arith.select %22, %217, %221 : vector<2x128xi1>, vector<2x128xf32>
    %223 = vector.extract_strided_slice %222 {offsets = [0, 0], sizes = [2, 32], strides = [1, 1]} : vector<2x128xf32> to vector<2x32xf32>
    %224 = vector.extract_strided_slice %222 {offsets = [0, 32], sizes = [2, 32], strides = [1, 1]} : vector<2x128xf32> to vector<2x32xf32>
    %225 = vector.extract_strided_slice %222 {offsets = [0, 64], sizes = [2, 32], strides = [1, 1]} : vector<2x128xf32> to vector<2x32xf32>
    %226 = vector.extract_strided_slice %222 {offsets = [0, 96], sizes = [2, 32], strides = [1, 1]} : vector<2x128xf32> to vector<2x32xf32>
    %227 = arith.mulf %224, %183 : vector<2x32xf32>
    %228 = arith.mulf %223, %225 : vector<2x32xf32>
    %229 = arith.addf %227, %228 : vector<2x32xf32>
    %230 = math.tanh %229 : vector<2x32xf32>
    %231 = arith.mulf %226, %230 : vector<2x32xf32>
    %232 = tpu.concatenate %231, %207 in 1 : vector<2x32xf32>, vector<2x32xf32> -> vector<2x64xf32>
    %cst_61 = arith.constant dense<0.000000e+00> : vector<2x256xf32>
    %233 = tpu.matmul %232, %13, %cst_61 {dimension_numbers = #tpu.dot_dimension_numbers<[1], [0], [0], [1], [0, 0, 1, 1], [], []>} : vector<2x64xf32>, vector<64x256xf32>, vector<2x256xf32> -> vector<2x256xf32>
    %234 = vector.broadcast %16 : vector<1x256xf32> to vector<2x256xf32>
    %235 = arith.addf %233, %234 : vector<2x256xf32>
    %236 = vector.extract_strided_slice %235 {offsets = [0, 0], sizes = [2, 128], strides = [1, 1]} : vector<2x256xf32> to vector<2x128xf32>
    %237 = vector.extract_strided_slice %235 {offsets = [0, 128], sizes = [2, 128], strides = [1, 1]} : vector<2x256xf32> to vector<2x128xf32>
    %238 = arith.mulf %237, %25 : vector<2x128xf32>
    %239 = math.tanh %238 : vector<2x128xf32>
    %cst_62 = arith.constant 5.000000e-01 : f32
    %240 = vector.broadcast %cst_62 : f32 to vector<2x128xf32>
    %241 = arith.mulf %240, %239 : vector<2x128xf32>
    %cst_63 = arith.constant 5.000000e-01 : f32
    %242 = vector.broadcast %cst_63 : f32 to vector<2x128xf32>
    %243 = arith.addf %241, %242 : vector<2x128xf32>
    %244 = arith.select %22, %239, %243 : vector<2x128xi1>, vector<2x128xf32>
    %245 = vector.extract_strided_slice %244 {offsets = [0, 0], sizes = [2, 32], strides = [1, 1]} : vector<2x128xf32> to vector<2x32xf32>
    %246 = vector.extract_strided_slice %244 {offsets = [0, 32], sizes = [2, 32], strides = [1, 1]} : vector<2x128xf32> to vector<2x32xf32>
    %247 = vector.extract_strided_slice %244 {offsets = [0, 64], sizes = [2, 32], strides = [1, 1]} : vector<2x128xf32> to vector<2x32xf32>
    %248 = vector.extract_strided_slice %244 {offsets = [0, 96], sizes = [2, 32], strides = [1, 1]} : vector<2x128xf32> to vector<2x32xf32>
    %249 = arith.mulf %246, %205 : vector<2x32xf32>
    %250 = arith.mulf %245, %247 : vector<2x32xf32>
    %251 = arith.addf %249, %250 : vector<2x32xf32>
    %252 = math.tanh %251 : vector<2x32xf32>
    %253 = arith.mulf %248, %252 : vector<2x32xf32>
    %254 = arith.index_cast %c4_i32 : i32 to index
    %c0_64 = arith.constant 0 : index
    %c0_65 = arith.constant 0 : index
    %255 = vector.load %arg12[%254, %c0_64, %c0_65] : memref<8x2x32xf32, #tpu.memory_space<vmem>>, vector<1x2x32xf32>
    %256 = vector.shape_cast %255 : vector<1x2x32xf32> to vector<2x32xf32>
    %257 = vector.shape_cast %253 : vector<2x32xf32> to vector<1x2x32xf32>
    tpu.vector_store %arg12[%254, %c0_64, %c0_65], %257 {strides = array<i32>} : memref<8x2x32xf32, #tpu.memory_space<vmem>>, vector<1x2x32xf32>,
    %c5_i32 = arith.constant 5 : i32
    %c2_i32_66 = arith.constant 2 : i32
    %258 = arith.muli %c5_i32, %c2_i32_66 : i32
    %259 = arith.index_cast %258 : i32 to index
    %c0_67 = arith.constant 0 : index
    %260 = vector.load %arg11[%259, %c0_67] : memref<16x128xf32, #tpu.memory_space<vmem>>, vector<2x128xf32>
    %261 = arith.addf %260, %236 : vector<2x128xf32>
    %262 = arith.mulf %261, %25 : vector<2x128xf32>
    %263 = math.tanh %262 : vector<2x128xf32>
    %cst_68 = arith.constant 5.000000e-01 : f32
    %264 = vector.broadcast %cst_68 : f32 to vector<2x128xf32>
    %265 = arith.mulf %264, %263 : vector<2x128xf32>
    %cst_69 = arith.constant 5.000000e-01 : f32
    %266 = vector.broadcast %cst_69 : f32 to vector<2x128xf32>
    %267 = arith.addf %265, %266 : vector<2x128xf32>
    %268 = arith.select %22, %263, %267 : vector<2x128xi1>, vector<2x128xf32>
    %269 = vector.extract_strided_slice %268 {offsets = [0, 0], sizes = [2, 32], strides = [1, 1]} : vector<2x128xf32> to vector<2x32xf32>
    %270 = vector.extract_strided_slice %268 {offsets = [0, 32], sizes = [2, 32], strides = [1, 1]} : vector<2x128xf32> to vector<2x32xf32>
    %271 = vector.extract_strided_slice %268 {offsets = [0, 64], sizes = [2, 32], strides = [1, 1]} : vector<2x128xf32> to vector<2x32xf32>
    %272 = vector.extract_strided_slice %268 {offsets = [0, 96], sizes = [2, 32], strides = [1, 1]} : vector<2x128xf32> to vector<2x32xf32>
    %273 = arith.mulf %270, %229 : vector<2x32xf32>
    %274 = arith.mulf %269, %271 : vector<2x32xf32>
    %275 = arith.addf %273, %274 : vector<2x32xf32>
    %276 = math.tanh %275 : vector<2x32xf32>
    %277 = arith.mulf %272, %276 : vector<2x32xf32>
    %278 = tpu.concatenate %277, %253 in 1 : vector<2x32xf32>, vector<2x32xf32> -> vector<2x64xf32>
    %cst_70 = arith.constant dense<0.000000e+00> : vector<2x256xf32>
    %279 = tpu.matmul %278, %13, %cst_70 {dimension_numbers = #tpu.dot_dimension_numbers<[1], [0], [0], [1], [0, 0, 1, 1], [], []>} : vector<2x64xf32>, vector<64x256xf32>, vector<2x256xf32> -> vector<2x256xf32>
    %280 = vector.broadcast %16 : vector<1x256xf32> to vector<2x256xf32>
    %281 = arith.addf %279, %280 : vector<2x256xf32>
    %282 = vector.extract_strided_slice %281 {offsets = [0, 0], sizes = [2, 128], strides = [1, 1]} : vector<2x256xf32> to vector<2x128xf32>
    %283 = vector.extract_strided_slice %281 {offsets = [0, 128], sizes = [2, 128], strides = [1, 1]} : vector<2x256xf32> to vector<2x128xf32>
    %284 = arith.mulf %283, %25 : vector<2x128xf32>
    %285 = math.tanh %284 : vector<2x128xf32>
    %cst_71 = arith.constant 5.000000e-01 : f32
    %286 = vector.broadcast %cst_71 : f32 to vector<2x128xf32>
    %287 = arith.mulf %286, %285 : vector<2x128xf32>
    %cst_72 = arith.constant 5.000000e-01 : f32
    %288 = vector.broadcast %cst_72 : f32 to vector<2x128xf32>
    %289 = arith.addf %287, %288 : vector<2x128xf32>
    %290 = arith.select %22, %285, %289 : vector<2x128xi1>, vector<2x128xf32>
    %291 = vector.extract_strided_slice %290 {offsets = [0, 0], sizes = [2, 32], strides = [1, 1]} : vector<2x128xf32> to vector<2x32xf32>
    %292 = vector.extract_strided_slice %290 {offsets = [0, 32], sizes = [2, 32], strides = [1, 1]} : vector<2x128xf32> to vector<2x32xf32>
    %293 = vector.extract_strided_slice %290 {offsets = [0, 64], sizes = [2, 32], strides = [1, 1]} : vector<2x128xf32> to vector<2x32xf32>
    %294 = vector.extract_strided_slice %290 {offsets = [0, 96], sizes = [2, 32], strides = [1, 1]} : vector<2x128xf32> to vector<2x32xf32>
    %295 = arith.mulf %292, %251 : vector<2x32xf32>
    %296 = arith.mulf %291, %293 : vector<2x32xf32>
    %297 = arith.addf %295, %296 : vector<2x32xf32>
    %298 = math.tanh %297 : vector<2x32xf32>
    %299 = arith.mulf %294, %298 : vector<2x32xf32>
    %300 = arith.index_cast %c5_i32 : i32 to index
    %c0_73 = arith.constant 0 : index
    %c0_74 = arith.constant 0 : index
    %301 = vector.load %arg12[%300, %c0_73, %c0_74] : memref<8x2x32xf32, #tpu.memory_space<vmem>>, vector<1x2x32xf32>
    %302 = vector.shape_cast %301 : vector<1x2x32xf32> to vector<2x32xf32>
    %303 = vector.shape_cast %299 : vector<2x32xf32> to vector<1x2x32xf32>
    tpu.vector_store %arg12[%300, %c0_73, %c0_74], %303 {strides = array<i32>} : memref<8x2x32xf32, #tpu.memory_space<vmem>>, vector<1x2x32xf32>,
    %c6_i32 = arith.constant 6 : i32
    %c2_i32_75 = arith.constant 2 : i32
    %304 = arith.muli %c6_i32, %c2_i32_75 : i32
    %305 = arith.index_cast %304 : i32 to index
    %c0_76 = arith.constant 0 : index
    %306 = vector.load %arg11[%305, %c0_76] : memref<16x128xf32, #tpu.memory_space<vmem>>, vector<2x128xf32>
    %307 = arith.addf %306, %282 : vector<2x128xf32>
    %308 = arith.mulf %307, %25 : vector<2x128xf32>
    %309 = math.tanh %308 : vector<2x128xf32>
    %cst_77 = arith.constant 5.000000e-01 : f32
    %310 = vector.broadcast %cst_77 : f32 to vector<2x128xf32>
    %311 = arith.mulf %310, %309 : vector<2x128xf32>
    %cst_78 = arith.constant 5.000000e-01 : f32
    %312 = vector.broadcast %cst_78 : f32 to vector<2x128xf32>
    %313 = arith.addf %311, %312 : vector<2x128xf32>
    %314 = arith.select %22, %309, %313 : vector<2x128xi1>, vector<2x128xf32>
    %315 = vector.extract_strided_slice %314 {offsets = [0, 0], sizes = [2, 32], strides = [1, 1]} : vector<2x128xf32> to vector<2x32xf32>
    %316 = vector.extract_strided_slice %314 {offsets = [0, 32], sizes = [2, 32], strides = [1, 1]} : vector<2x128xf32> to vector<2x32xf32>
    %317 = vector.extract_strided_slice %314 {offsets = [0, 64], sizes = [2, 32], strides = [1, 1]} : vector<2x128xf32> to vector<2x32xf32>
    %318 = vector.extract_strided_slice %314 {offsets = [0, 96], sizes = [2, 32], strides = [1, 1]} : vector<2x128xf32> to vector<2x32xf32>
    %319 = arith.mulf %316, %275 : vector<2x32xf32>
    %320 = arith.mulf %315, %317 : vector<2x32xf32>
    %321 = arith.addf %319, %320 : vector<2x32xf32>
    %322 = math.tanh %321 : vector<2x32xf32>
    %323 = arith.mulf %318, %322 : vector<2x32xf32>
    %324 = tpu.concatenate %323, %299 in 1 : vector<2x32xf32>, vector<2x32xf32> -> vector<2x64xf32>
    %cst_79 = arith.constant dense<0.000000e+00> : vector<2x256xf32>
    %325 = tpu.matmul %324, %13, %cst_79 {dimension_numbers = #tpu.dot_dimension_numbers<[1], [0], [0], [1], [0, 0, 1, 1], [], []>} : vector<2x64xf32>, vector<64x256xf32>, vector<2x256xf32> -> vector<2x256xf32>
    %326 = vector.broadcast %16 : vector<1x256xf32> to vector<2x256xf32>
    %327 = arith.addf %325, %326 : vector<2x256xf32>
    %328 = vector.extract_strided_slice %327 {offsets = [0, 0], sizes = [2, 128], strides = [1, 1]} : vector<2x256xf32> to vector<2x128xf32>
    %329 = vector.extract_strided_slice %327 {offsets = [0, 128], sizes = [2, 128], strides = [1, 1]} : vector<2x256xf32> to vector<2x128xf32>
    %330 = arith.mulf %329, %25 : vector<2x128xf32>
    %331 = math.tanh %330 : vector<2x128xf32>
    %cst_80 = arith.constant 5.000000e-01 : f32
    %332 = vector.broadcast %cst_80 : f32 to vector<2x128xf32>
    %333 = arith.mulf %332, %331 : vector<2x128xf32>
    %cst_81 = arith.constant 5.000000e-01 : f32
    %334 = vector.broadcast %cst_81 : f32 to vector<2x128xf32>
    %335 = arith.addf %333, %334 : vector<2x128xf32>
    %336 = arith.select %22, %331, %335 : vector<2x128xi1>, vector<2x128xf32>
    %337 = vector.extract_strided_slice %336 {offsets = [0, 0], sizes = [2, 32], strides = [1, 1]} : vector<2x128xf32> to vector<2x32xf32>
    %338 = vector.extract_strided_slice %336 {offsets = [0, 32], sizes = [2, 32], strides = [1, 1]} : vector<2x128xf32> to vector<2x32xf32>
    %339 = vector.extract_strided_slice %336 {offsets = [0, 64], sizes = [2, 32], strides = [1, 1]} : vector<2x128xf32> to vector<2x32xf32>
    %340 = vector.extract_strided_slice %336 {offsets = [0, 96], sizes = [2, 32], strides = [1, 1]} : vector<2x128xf32> to vector<2x32xf32>
    %341 = arith.mulf %338, %297 : vector<2x32xf32>
    %342 = arith.mulf %337, %339 : vector<2x32xf32>
    %343 = arith.addf %341, %342 : vector<2x32xf32>
    %344 = math.tanh %343 : vector<2x32xf32>
    %345 = arith.mulf %340, %344 : vector<2x32xf32>
    %346 = arith.index_cast %c6_i32 : i32 to index
    %c0_82 = arith.constant 0 : index
    %c0_83 = arith.constant 0 : index
    %347 = vector.load %arg12[%346, %c0_82, %c0_83] : memref<8x2x32xf32, #tpu.memory_space<vmem>>, vector<1x2x32xf32>
    %348 = vector.shape_cast %347 : vector<1x2x32xf32> to vector<2x32xf32>
    %349 = vector.shape_cast %345 : vector<2x32xf32> to vector<1x2x32xf32>
    tpu.vector_store %arg12[%346, %c0_82, %c0_83], %349 {strides = array<i32>} : memref<8x2x32xf32, #tpu.memory_space<vmem>>, vector<1x2x32xf32>,
    %c7_i32 = arith.constant 7 : i32
    %c2_i32_84 = arith.constant 2 : i32
    %350 = arith.muli %c7_i32, %c2_i32_84 : i32
    %351 = arith.index_cast %350 : i32 to index
    %c0_85 = arith.constant 0 : index
    %352 = vector.load %arg11[%351, %c0_85] : memref<16x128xf32, #tpu.memory_space<vmem>>, vector<2x128xf32>
    %353 = arith.addf %352, %328 : vector<2x128xf32>
    %354 = arith.mulf %353, %25 : vector<2x128xf32>
    %355 = math.tanh %354 : vector<2x128xf32>
    %cst_86 = arith.constant 5.000000e-01 : f32
    %356 = vector.broadcast %cst_86 : f32 to vector<2x128xf32>
    %357 = arith.mulf %356, %355 : vector<2x128xf32>
    %cst_87 = arith.constant 5.000000e-01 : f32
    %358 = vector.broadcast %cst_87 : f32 to vector<2x128xf32>
    %359 = arith.addf %357, %358 : vector<2x128xf32>
    %360 = arith.select %22, %355, %359 : vector<2x128xi1>, vector<2x128xf32>
    %361 = vector.extract_strided_slice %360 {offsets = [0, 0], sizes = [2, 32], strides = [1, 1]} : vector<2x128xf32> to vector<2x32xf32>
    %362 = vector.extract_strided_slice %360 {offsets = [0, 32], sizes = [2, 32], strides = [1, 1]} : vector<2x128xf32> to vector<2x32xf32>
    %363 = vector.extract_strided_slice %360 {offsets = [0, 64], sizes = [2, 32], strides = [1, 1]} : vector<2x128xf32> to vector<2x32xf32>
    %364 = vector.extract_strided_slice %360 {offsets = [0, 96], sizes = [2, 32], strides = [1, 1]} : vector<2x128xf32> to vector<2x32xf32>
    %365 = arith.mulf %362, %321 : vector<2x32xf32>
    %366 = arith.mulf %361, %363 : vector<2x32xf32>
    %367 = arith.addf %365, %366 : vector<2x32xf32>
    %368 = math.tanh %367 : vector<2x32xf32>
    %369 = arith.mulf %364, %368 : vector<2x32xf32>
    %370 = tpu.concatenate %369, %345 in 1 : vector<2x32xf32>, vector<2x32xf32> -> vector<2x64xf32>
    %cst_88 = arith.constant dense<0.000000e+00> : vector<2x256xf32>
    %371 = tpu.matmul %370, %13, %cst_88 {dimension_numbers = #tpu.dot_dimension_numbers<[1], [0], [0], [1], [0, 0, 1, 1], [], []>} : vector<2x64xf32>, vector<64x256xf32>, vector<2x256xf32> -> vector<2x256xf32>
    %372 = vector.broadcast %16 : vector<1x256xf32> to vector<2x256xf32>
    %373 = arith.addf %371, %372 : vector<2x256xf32>
    %374 = vector.extract_strided_slice %373 {offsets = [0, 0], sizes = [2, 128], strides = [1, 1]} : vector<2x256xf32> to vector<2x128xf32>
    %375 = vector.extract_strided_slice %373 {offsets = [0, 128], sizes = [2, 128], strides = [1, 1]} : vector<2x256xf32> to vector<2x128xf32>
    %376 = arith.mulf %375, %25 : vector<2x128xf32>
    %377 = math.tanh %376 : vector<2x128xf32>
    %cst_89 = arith.constant 5.000000e-01 : f32
    %378 = vector.broadcast %cst_89 : f32 to vector<2x128xf32>
    %379 = arith.mulf %378, %377 : vector<2x128xf32>
    %cst_90 = arith.constant 5.000000e-01 : f32
    %380 = vector.broadcast %cst_90 : f32 to vector<2x128xf32>
    %381 = arith.addf %379, %380 : vector<2x128xf32>
    %382 = arith.select %22, %377, %381 : vector<2x128xi1>, vector<2x128xf32>
    %383 = vector.extract_strided_slice %382 {offsets = [0, 0], sizes = [2, 32], strides = [1, 1]} : vector<2x128xf32> to vector<2x32xf32>
    %384 = vector.extract_strided_slice %382 {offsets = [0, 32], sizes = [2, 32], strides = [1, 1]} : vector<2x128xf32> to vector<2x32xf32>
    %385 = vector.extract_strided_slice %382 {offsets = [0, 64], sizes = [2, 32], strides = [1, 1]} : vector<2x128xf32> to vector<2x32xf32>
    %386 = vector.extract_strided_slice %382 {offsets = [0, 96], sizes = [2, 32], strides = [1, 1]} : vector<2x128xf32> to vector<2x32xf32>
    %387 = arith.mulf %384, %343 : vector<2x32xf32>
    %388 = arith.mulf %383, %385 : vector<2x32xf32>
    %389 = arith.addf %387, %388 : vector<2x32xf32>
    %390 = math.tanh %389 : vector<2x32xf32>
    %391 = arith.mulf %386, %390 : vector<2x32xf32>
    %392 = arith.index_cast %c7_i32 : i32 to index
    %c0_91 = arith.constant 0 : index
    %c0_92 = arith.constant 0 : index
    %393 = vector.load %arg12[%392, %c0_91, %c0_92] : memref<8x2x32xf32, #tpu.memory_space<vmem>>, vector<1x2x32xf32>
    %394 = vector.shape_cast %393 : vector<1x2x32xf32> to vector<2x32xf32>
    %395 = vector.shape_cast %391 : vector<2x32xf32> to vector<1x2x32xf32>
    tpu.vector_store %arg12[%392, %c0_91, %c0_92], %395 {strides = array<i32>} : memref<8x2x32xf32, #tpu.memory_space<vmem>>, vector<1x2x32xf32>,
    %c8_i32 = arith.constant 8 : i32
    %c0_93 = arith.constant 0 : index
    %c0_94 = arith.constant 0 : index
    %c0_95 = arith.constant 0 : index
    %396 = vector.load %arg12[%c0_93, %c0_94, %c0_95] : memref<8x2x32xf32, #tpu.memory_space<vmem>>, vector<8x2x32xf32>
    %c0_96 = arith.constant 0 : index
    %c0_97 = arith.constant 0 : index
    %c0_98 = arith.constant 0 : index
    %397 = vector.load %arg8[%c0_96, %c0_97, %c0_98] : memref<1x1x32xf32, #tpu.memory_space<vmem>>, vector<1x1x32xf32>
    %398 = vector.broadcast %397 : vector<1x1x32xf32> to vector<8x2x32xf32>
    %399 = arith.mulf %396, %398 : vector<8x2x32xf32>
    %cst_99 = arith.constant dense<0.000000e+00> : vector<8x2xf32>
    %400 = vector.multi_reduction <add>, %399, %cst_99 [2] : vector<8x2x32xf32> to vector<8x2xf32>
    %401 = vector.shape_cast %400 : vector<8x2xf32> to vector<8x2x1xf32>
    %c0_100 = arith.constant 0 : index
    %c0_101 = arith.constant 0 : index
    %c0_102 = arith.constant 0 : index
    %402 = vector.load %arg9[%c0_100, %c0_101, %c0_102] : memref<1x1x1xf32, #tpu.memory_space<vmem>>, vector<1x1x1xf32>
    %403 = vector.broadcast %402 : vector<1x1x1xf32> to vector<8x2x1xf32>
    %404 = arith.addf %401, %403 : vector<8x2x1xf32>
    %c0_103 = arith.constant 0 : index
    %c0_104 = arith.constant 0 : index
    %c0_105 = arith.constant 0 : index
    %405 = vector.load %arg10[%c0_103, %c0_104, %c0_105] : memref<8x2x1xf32, #tpu.memory_space<vmem>>, vector<8x2x1xf32>
    tpu.vector_store %arg10[%c0_103, %c0_104, %c0_105], %404 {strides = array<i32>} : memref<8x2x1xf32, #tpu.memory_space<vmem>>, vector<8x2x1xf32>,
    return
  }
  func.func @transform_0(%arg0: i32) -> (i32, i32) {
    %c0_i32 = arith.constant 0 : i32
    %c0_i32_0 = arith.constant 0 : i32
    %c0_i32_1 = arith.constant 0 : i32
    return %c0_i32, %c0_i32_0 : i32, i32
  }
  func.func @transform_1(%arg0: i32) -> (i32, i32) {
    %c0_i32 = arith.constant 0 : i32
    %c0_i32_0 = arith.constant 0 : i32
    %c0_i32_1 = arith.constant 0 : i32
    return %c0_i32, %c0_i32_0 : i32, i32
  }
  func.func @transform_2(%arg0: i32) -> (i32, i32) {
    %c0_i32 = arith.constant 0 : i32
    %c0_i32_0 = arith.constant 0 : i32
    %c0_i32_1 = arith.constant 0 : i32
    return %c0_i32, %c0_i32_0 : i32, i32
  }
  func.func @transform_3(%arg0: i32) -> (i32, i32) {
    %c0_i32 = arith.constant 0 : i32
    %c0_i32_0 = arith.constant 0 : i32
    %c0_i32_1 = arith.constant 0 : i32
    return %c0_i32, %c0_i32_0 : i32, i32
  }
  func.func @transform_4(%arg0: i32) -> (i32, i32) {
    %c0_i32 = arith.constant 0 : i32
    %c0_i32_0 = arith.constant 0 : i32
    %c0_i32_1 = arith.constant 0 : i32
    return %c0_i32, %c0_i32_0 : i32, i32
  }
  func.func @transform_5(%arg0: i32) -> (i32, i32) {
    %c0_i32 = arith.constant 0 : i32
    %c0_i32_0 = arith.constant 0 : i32
    %c0_i32_1 = arith.constant 0 : i32
    return %c0_i32, %c0_i32_0 : i32, i32
  }
  func.func @transform_6(%arg0: i32) -> (i32, i32) {
    %c0_i32 = arith.constant 0 : i32
    %c0_i32_0 = arith.constant 0 : i32
    %c0_i32_1 = arith.constant 0 : i32
    return %c0_i32, %c0_i32_0 : i32, i32
  }
  func.func @transform_7(%arg0: i32) -> (i32, i32, i32) {
    %c0_i32 = arith.constant 0 : i32
    %c0_i32_0 = arith.constant 0 : i32
    %c0_i32_1 = arith.constant 0 : i32
    %c0_i32_2 = arith.constant 0 : i32
    return %c0_i32, %c0_i32_0, %c0_i32_1 : i32, i32, i32
  }
  func.func @transform_8(%arg0: i32) -> (i32, i32, i32) {
    %c0_i32 = arith.constant 0 : i32
    %c0_i32_0 = arith.constant 0 : i32
    %c0_i32_1 = arith.constant 0 : i32
    %c0_i32_2 = arith.constant 0 : i32
    return %c0_i32, %c0_i32_0, %c0_i32_1 : i32, i32, i32
  }
  func.func @transform_9(%arg0: i32) -> (i32, i32, i32) {
    %c0_i32 = arith.constant 0 : i32
    %c0_i32_0 = arith.constant 0 : i32
    %c0_i32_1 = arith.constant 0 : i32
    %c0_i32_2 = arith.constant 0 : i32
    return %c0_i32, %c0_i32_0, %c0_i32_1 : i32, i32, i32
  }
}

</mosaic_0001>

<llo_original>
// kernel: lstm_forward.1
$region0: #{lstm_forward.1}
  #allocation0 [shape = 'u32[]', space=smem, size = 0x4, offset = 0x4, fixed_abs, tag = 'smem constant byte address 0x4 - core index']
  #allocation1 [shape = 'u32[72,128]{1,0:T(1,128)}', space=vmem, size = 0x9000, scoped, tag = 'internal scratch']
  #allocation2 [shape = 'f32[16,128]{1,0:T(8,128)}', space=vmem, size = 0x2000, scoped, tag = 'scratch operand']
  #allocation3 [shape = 'f32[8,2,32]{2,1,0:T(2,128)}', space=vmem, size = 0x2000, scoped, tag = 'scratch operand']
  #allocation4 [shape = 'f32[1,1,1]{2,1,0:T(1,128)S(1)}', space=vmem, size = 0x200, scoped, tag = 'scoped memory for lstm_forward.1']
  %s0 = inlined_call_operand.vmem [shape: f32[16,4], index: 0, kind: input, shape index: {}]
  %s1 = inlined_call_operand.hbm [shape: f32[4,128], index: 1, kind: input, shape index: {}]
  %s2 = inlined_call_operand.vmem [shape: f32[1,128], index: 2, kind: input, shape index: {}]
  %s3 = inlined_call_operand.hbm [shape: f32[32,128], index: 3, kind: input, shape index: {}]
  %s4 = inlined_call_operand.vmem [shape: f32[32,128], index: 4, kind: input, shape index: {}]
  %s5 = inlined_call_operand.hbm [shape: f32[32,128], index: 5, kind: input, shape index: {}]
  %s6 = inlined_call_operand.vmem [shape: f32[1,128], index: 6, kind: input, shape index: {}]
  %s7 = inlined_call_operand.vmem [shape: f32[1,1,32], index: 7, kind: input, shape index: {}]
  %s8 = inlined_call_operand.<no memory space> [shape: f32[1,1,1], index: 8, kind: input, shape index: {}]
  %s9 = inlined_call_operand.vmem [shape: f32[8,2,1], index: 9, kind: output, shape index: {}]
  %s10 = sld [smem:[#allocation0]]
  $region58: #{lstm_forward.1} parent=0
    _
  %s12 = ssub.s32 1, %s10
  %s13 = scalar_select 0, %s12, %s10
  %v14 = vstv %s8
  %15 = vst [vmem:[#allocation4] sm:$0x1] %v14
  $region1: #{lstm_forward.1} parent=0
    #allocation5 [shape = 'u8[2048]{0}', space=vmem, size = 0x800, scoped, tag = 'input window, operand 1, single buffered']
    #allocation6 [shape = 's32[1]{0}', space=sflag, size = 0x4, scoped, tag = 'scoped memory for lstm_forward.1']
    #allocation7 [shape = 'u8[16384]{0}', space=vmem, size = 0x4000, scoped, tag = 'input window, operand 3, single buffered']
    #allocation8 [shape = 's32[1]{0}', space=sflag, size = 0x4, scoped, tag = 'scoped memory for lstm_forward.1']
    #allocation9 [shape = 'u8[16384]{0}', space=vmem, size = 0x4000, scoped, tag = 'input window, operand 5, single buffered']
    %16 = vsyncpa [#allocation6], 0
    %17 = vsyncpa [#allocation8], 0
    // Predicated region
    $region2: #{lstm_forward.1} parent=1 // pred_check
      _
    $region3: #{lstm_forward.1} parent=1 // pred_check_branch
      %19 = sbr.rel (0) target = $region5
    $region4: #{lstm_forward.1} parent=1 // pred_region
      _
    $region5: #{lstm_forward.1} parent=1 // pred_fallthru
      _
    // Predicated region
    $region6: #{lstm_forward.1} parent=1 // pred_check
      _
    $region7: #{lstm_forward.1} parent=1 // pred_check_branch
      %21 = sbr.rel (0) target = $region9
    $region8: #{lstm_forward.1} parent=1 // pred_region
      %23 = vsyncadd [#allocation6], 0
      %s25 = sshll.u32 %s1, 4
      %s26 = int_to_ptr.hbm [resolvable:$true] %s25
      %s27 = sshll.u32 [#allocation5], 4
      %s28 = int_to_ptr.vmem [resolvable:$true] %s27
      %30 = dma.hbm_to_vmem [thread:$0]  %s26, 64, %s28, [#allocation6]
    $region9: #{lstm_forward.1} parent=1 // pred_fallthru
      _
    // Predicated region
    $region10: #{lstm_forward.1} parent=1 // pred_check
      _
    $region11: #{lstm_forward.1} parent=1 // pred_check_branch
      %32 = sbr.rel (0) target = $region13
    $region12: #{lstm_forward.1} parent=1 // pred_region
      _
    $region13: #{lstm_forward.1} parent=1 // pred_fallthru
      _
    // Predicated region
    $region14: #{lstm_forward.1} parent=1 // pred_check
      _
    $region15: #{lstm_forward.1} parent=1 // pred_check_branch
      %34 = sbr.rel (0) target = $region17
    $region16: #{lstm_forward.1} parent=1 // pred_region
      %36 = vsyncadd [#allocation8], 0
      %s37 = sshll.u32 %s3, 4
      %s38 = int_to_ptr.hbm [resolvable:$true] %s37
      %s39 = sshll.u32 [#allocation7], 4
      %s40 = int_to_ptr.vmem [resolvable:$true] %s39
      %45 = dma.hbm_to_vmem [thread:$0]  %s38, 512, %s40, [#allocation8], 128, 128, 8
    $region17: #{lstm_forward.1} parent=1 // pred_fallthru
      _
    // Predicated region
    $region18: #{lstm_forward.1} parent=1 // pred_check
      _
    $region19: #{lstm_forward.1} parent=1 // pred_check_branch
      %47 = sbr.rel (0) target = $region21
    $region20: #{lstm_forward.1} parent=1 // pred_region
      _
    $region21: #{lstm_forward.1} parent=1 // pred_fallthru
      _
    // Predicated region
    $region22: #{lstm_forward.1} parent=1 // pred_check
      _
    $region23: #{lstm_forward.1} parent=1 // pred_check_branch
      %49 = sbr.rel (0) target = $region25
    $region24: #{lstm_forward.1} parent=1 // pred_region
      %51 = vsyncadd [#allocation8], 0
      %s52 = sshll.u32 %s5, 4
      %s53 = int_to_ptr.hbm [resolvable:$true] %s52
      %s54 = sshll.u32 [#allocation9], 4
      %s55 = int_to_ptr.vmem [resolvable:$true] %s54
      %60 = dma.hbm_to_vmem [thread:$0]  %s53, 512, %s55, [#allocation8], 128, 128, 8
    $region25: #{lstm_forward.1} parent=1 // pred_fallthru
      _
    // Predicated region
    $region26: #{lstm_forward.1} parent=1 // pred_check
      _
    $region27: #{lstm_forward.1} parent=1 // pred_check_branch
      %62 = sbr.rel (0) target = $region29
    $region28: #{lstm_forward.1} parent=1 // pred_region
      _
    $region29: #{lstm_forward.1} parent=1 // pred_fallthru
      _
    // Predicated region
    $region30: #{lstm_forward.1} parent=1 // pred_check
      _
    $region31: #{lstm_forward.1} parent=1 // pred_check_branch
      %64 = sbr.rel (0) target = $region33
    $region32: #{lstm_forward.1} parent=1 // pred_region
      _
    $region33: #{lstm_forward.1} parent=1 // pred_fallthru
      _
    // Predicated region
    $region34: #{lstm_forward.1} parent=1 // pred_check
      _
    $region35: #{lstm_forward.1} parent=1 // pred_check_branch
      %66 = sbr.rel (0) target = $region37
    $region36: #{lstm_forward.1} parent=1 // pred_region
      _
    $region37: #{lstm_forward.1} parent=1 // pred_fallthru
      _
    // Predicated region
    $region38: #{lstm_forward.1} parent=1 // pred_check
      _
    $region39: #{lstm_forward.1} parent=1 // pred_check_branch
      %68 = sbr.rel (0) target = $region41
    $region40: #{lstm_forward.1} parent=1 // pred_region
      %70 = dma.done [#allocation6], 64
    $region41: #{lstm_forward.1} parent=1 // pred_fallthru
      _
    // Predicated region
    $region42: #{lstm_forward.1} parent=1 // pred_check
      _
    $region43: #{lstm_forward.1} parent=1 // pred_check_branch
      %72 = sbr.rel (0) target = $region45
    $region44: #{lstm_forward.1} parent=1 // pred_region
      %74 = dma.done [#allocation8], 512
    $region45: #{lstm_forward.1} parent=1 // pred_fallthru
      _
    // Predicated region
    $region46: #{lstm_forward.1} parent=1 // pred_check
      _
    $region47: #{lstm_forward.1} parent=1 // pred_check_branch
      %76 = sbr.rel (0) target = $region49
    $region48: #{lstm_forward.1} parent=1 // pred_region
      %78 = dma.done [#allocation8], 512
    $region49: #{lstm_forward.1} parent=1 // pred_fallthru
      _
    %v79 = vld [vmem:[%s0] sm:$0xff]
    %v80 = vld [vmem:[%s0 + $0x8] sm:$0xff]
    %v81 = vld [vmem:[#allocation5] sm:$0xf]
    %v82 = vld [vmem:[%s2] sm:$0x1]
    %v84 = vperm.slane %v82, 0
    %vm86 = vcmask 31744
    %v88 = vsel %vm86, %v79, 0
    %v91 = vsel %vm86, %v80, 0
    %vm93 = vcmask 1043456
    %v95 = vsel %vm93, %v81, 0
    %97 = vmatpush.msra.mxu0 0.0
    %98 = vmatpush.msra.mxu0 0.0
    %99 = vmatpush.msra.mxu0 0.0
    %100 = vmatpush.msra.mxu0 0.0
    %101 = vmatpush.msra.mxu0 0.0
    %102 = vmatpush.msra.mxu0 0.0
    %103 = vmatpush.msra.mxu0 0.0
    %104 = vmatpush.msra.mxu0 0.0
    %105 = vmatpush.msra.mxu0 0.0
    %106 = vmatpush.msra.mxu0 0.0
    %107 = vmatpush.msra.mxu0 0.0
    %108 = vmatpush.msra.mxu0 0.0
    %109 = vmatpush.msra.mxu0 0.0
    %110 = vmatpush.msra.mxu0 0.0
    %111 = vmatpush.msra.mxu0 0.0
    %112 = vmatpush.msra.mxu0 %v95
    %113 = vmatmul.f32.gmra.mxu0 %v88
    %v114 = vpop.f32.mrf.mxu0
    %v115 = vadd.f32 %v84, %v114
    %116 = vmatmul.f32.gmra.mxu0 %v91
    %v117 = vpop.f32.mrf.mxu0
    %v118 = vadd.f32 %v84, %v117
    %119 = vdwg.mxu0
    %120 = vst [vmem:[#allocation2] sm:$0xff] %v115
    %121 = vst [vmem:[#allocation2 + $0x8] sm:$0xff] %v118
    %v122 = vld [vmem:[#allocation7] sm:$0xff]
    %v123 = vld [vmem:[#allocation7 + $0x8] sm:$0xff]
    %v124 = vld [vmem:[#allocation7 + $0x10] sm:$0xff]
    %v125 = vld [vmem:[#allocation7 + $0x18] sm:$0xff]
    %v126 = vld [vmem:[%s4] sm:$0xff]
    %v127 = vld [vmem:[%s4 + $0x8] sm:$0xff]
    %v128 = vld [vmem:[%s4 + $0x10] sm:$0xff]
    %v129 = vld [vmem:[%s4 + $0x18] sm:$0xff]
    %v130 = vld [vmem:[#allocation9] sm:$0xff]
    %v131 = vld [vmem:[#allocation9 + $0x8] sm:$0xff]
    %v132 = vld [vmem:[#allocation9 + $0x10] sm:$0xff]
    %v133 = vld [vmem:[#allocation9 + $0x18] sm:$0xff]
    %v134 = vld [vmem:[%s6] sm:$0x1]
    %v135 = vlaneseq
    %v136 = vand.u32 %v135, 127
    %vm137 = vcmp.ge.s32.totalorder %v136, 64
    %vm138 = vcmp.lt.s32.totalorder %v136, 96
    %vm139 = vmand %vm137, %vm138
    %v140 = vsel %vm139, 1.0, 0.5
    %v141 = vld [vmem:[#allocation2] sm:$0x3]
    %v142 = vadd.f32 %v141, 0.0
    %v143 = vmul.f32 %v142, %v140
    %v144 = vtanh.pop %v143
    %v145 = vmul.f32 %v144, 0.5
    %v146 = vadd.f32 %v145, 0.5
    %v147 = vsel %vm139, %v144, %v146
    %v148 = vmul.f32 %v147, 0.0
    %150 = vrot.lane.b32.xlu0 %v147, 64
    %v151 = vpop.permute.xlu0 %150
    %v153 = vmul.f32 %v147, %v151
    %155 = vrot.lane.b32.xlu0 %v153, 32
    %v156 = vpop.permute.xlu0 %155
    %v158 = vadd.f32 %v148, %v156
    %v159 = vtanh.pop %v158
    %161 = vrot.lane.b32.xlu0 %v159, 64
    %v162 = vpop.permute.xlu0 %161
    %v164 = vmul.f32 %v147, %v162
    %166 = vrot.lane.b32.xlu0 %v164, 32
    %v167 = vpop.permute.xlu0 %166
    %vm169 = vcmask 261120
    %v170 = vsel %vm169, %v167, 0.0
    %v171 = vperm.slane 0.0, 0
    %v172 = vperm.slane %v134, 0
    %vm173 = vcmask 523264
    %v175 = vsel %vm173, %v170, 0
    %177 = vmatpush.msra.mxu0 0.0
    %178 = vmatpush.msra.mxu0 0.0
    %179 = vmatpush.msra.mxu0 0.0
    %180 = vmatpush.msra.mxu0 0.0
    %181 = vmatpush.msra.mxu0 0.0
    %182 = vmatpush.msra.mxu0 0.0
    %183 = vmatpush.msra.mxu0 0.0
    %184 = vmatpush.msra.mxu0 0.0
    %185 = vmatpush.msra.mxu0 0.0
    %186 = vmatpush.msra.mxu0 0.0
    %187 = vmatpush.msra.mxu0 0.0
    %188 = vmatpush.msra.mxu0 0.0
    %189 = vmatpush.msra.mxu0 %v125
    %190 = vmatpush.msra.mxu0 %v124
    %191 = vmatpush.msra.mxu0 %v123
    %192 = vmatpush.msra.mxu0 %v122
    %193 = vmatmul.f32.gmra.mxu0 %v175
    %v194 = vpop.f32.mrf.mxu0
    %v195 = vadd.f32 %v171, %v194
    %196 = vdwg.mxu0
    %197 = vmatpush.msra.mxu0 0.0
    %198 = vmatpush.msra.mxu0 0.0
    %199 = vmatpush.msra.mxu0 0.0
    %200 = vmatpush.msra.mxu0 0.0
    %201 = vmatpush.msra.mxu0 0.0
    %202 = vmatpush.msra.mxu0 0.0
    %203 = vmatpush.msra.mxu0 0.0
    %204 = vmatpush.msra.mxu0 0.0
    %205 = vmatpush.msra.mxu0 %v133
    %206 = vmatpush.msra.mxu0 %v132
    %207 = vmatpush.msra.mxu0 %v131
    %208 = vmatpush.msra.mxu0 %v130
    %209 = vmatpush.msra.mxu0 %v129
    %210 = vmatpush.msra.mxu0 %v128
    %211 = vmatpush.msra.mxu0 %v127
    %212 = vmatpush.msra.mxu0 %v126
    %213 = vmatmul.f32.gmra.mxu0 %v175
    %v214 = vpop.f32.mrf.mxu0
    %v215 = vadd.f32 %v172, %v214
    %216 = vdwg.mxu0
    %v217 = vmul.f32 %v215, %v140
    %v218 = vtanh.pop %v217
    %v219 = vmul.f32 %v218, 0.5
    %v220 = vadd.f32 %v219, 0.5
    %v221 = vsel %vm139, %v218, %v220
    %v222 = vmul.f32 %v221, 0.0
    %224 = vrot.lane.b32.xlu0 %v221, 64
    %v225 = vpop.permute.xlu0 %224
    %v227 = vmul.f32 %v221, %v225
    %229 = vrot.lane.b32.xlu0 %v227, 32
    %v230 = vpop.permute.xlu0 %229
    %v232 = vadd.f32 %v222, %v230
    %v233 = vtanh.pop %v232
    %235 = vrot.lane.b32.xlu0 %v233, 64
    %v236 = vpop.permute.xlu0 %235
    %v238 = vmul.f32 %v221, %v236
    %240 = vrot.lane.b32.xlu0 %v238, 32
    %v241 = vpop.permute.xlu0 %240
    %vm243 = vcmask 254976
    %244 = vst.msk [vmem:[#allocation3] sm:$0x3] %vm243, %v241
    %v245 = vld [vmem:[#allocation2 + $0x2] sm:$0x3]
    %v246 = vadd.f32 %v245, %v195
    %v247 = vmul.f32 %v246, %v140
    %v248 = vtanh.pop %v247
    %v249 = vmul.f32 %v248, 0.5
    %v250 = vadd.f32 %v249, 0.5
    %v251 = vsel %vm139, %v248, %v250
    %v252 = vmul.f32 %v251, %v158
    %254 = vrot.lane.b32.xlu0 %v251, 64
    %v255 = vpop.permute.xlu0 %254
    %v257 = vmul.f32 %v251, %v255
    %259 = vrot.lane.b32.xlu0 %v257, 32
    %v260 = vpop.permute.xlu0 %259
    %v262 = vadd.f32 %v252, %v260
    %v263 = vtanh.pop %v262
    %265 = vrot.lane.b32.xlu0 %v263, 64
    %v266 = vpop.permute.xlu0 %265
    %v268 = vmul.f32 %v251, %v266
    %270 = vrot.lane.b32.xlu0 %v268, 32
    %v271 = vpop.permute.xlu0 %270
    %273 = vrot.lane.b32.xlu0 %v238, 64
    %v274 = vpop.permute.xlu0 %273
    %v276 = vsel %vm169, %v271, %v274
    %v278 = vsel %vm173, %v276, 0
    %280 = vmatpush.msra.mxu0 0.0
    %281 = vmatpush.msra.mxu0 0.0
    %282 = vmatpush.msra.mxu0 0.0
    %283 = vmatpush.msra.mxu0 0.0
    %284 = vmatpush.msra.mxu0 0.0
    %285 = vmatpush.msra.mxu0 0.0
    %286 = vmatpush.msra.mxu0 0.0
    %287 = vmatpush.msra.mxu0 0.0
    %288 = vmatpush.msra.mxu0 0.0
    %289 = vmatpush.msra.mxu0 0.0
    %290 = vmatpush.msra.mxu0 0.0
    %291 = vmatpush.msra.mxu0 0.0
    %292 = vmatpush.msra.mxu0 %v125
    %293 = vmatpush.msra.mxu0 %v124
    %294 = vmatpush.msra.mxu0 %v123
    %295 = vmatpush.msra.mxu0 %v122
    %296 = vmatmul.f32.gmra.mxu0 %v278
    %v297 = vpop.f32.mrf.mxu0
    %v298 = vadd.f32 %v171, %v297
    %299 = vdwg.mxu0
    %300 = vmatpush.msra.mxu0 0.0
    %301 = vmatpush.msra.mxu0 0.0
    %302 = vmatpush.msra.mxu0 0.0
    %303 = vmatpush.msra.mxu0 0.0
    %304 = vmatpush.msra.mxu0 0.0
    %305 = vmatpush.msra.mxu0 0.0
    %306 = vmatpush.msra.mxu0 0.0
    %307 = vmatpush.msra.mxu0 0.0
    %308 = vmatpush.msra.mxu0 %v133
    %309 = vmatpush.msra.mxu0 %v132
    %310 = vmatpush.msra.mxu0 %v131
    %311 = vmatpush.msra.mxu0 %v130
    %312 = vmatpush.msra.mxu0 %v129
    %313 = vmatpush.msra.mxu0 %v128
    %314 = vmatpush.msra.mxu0 %v127
    %315 = vmatpush.msra.mxu0 %v126
    %316 = vmatmul.f32.gmra.mxu0 %v278
    %v317 = vpop.f32.mrf.mxu0
    %v318 = vadd.f32 %v172, %v317
    %319 = vdwg.mxu0
    %v320 = vmul.f32 %v318, %v140
    %v321 = vtanh.pop %v320
    %v322 = vmul.f32 %v321, 0.5
    %v323 = vadd.f32 %v322, 0.5
    %v324 = vsel %vm139, %v321, %v323
    %v325 = vmul.f32 %v324, %v232
    %327 = vrot.lane.b32.xlu0 %v324, 64
    %v328 = vpop.permute.xlu0 %327
    %v330 = vmul.f32 %v324, %v328
    %332 = vrot.lane.b32.xlu0 %v330, 32
    %v333 = vpop.permute.xlu0 %332
    %v335 = vadd.f32 %v325, %v333
    %v336 = vtanh.pop %v335
    %338 = vrot.lane.b32.xlu0 %v336, 64
    %v339 = vpop.permute.xlu0 %338
    %v341 = vmul.f32 %v324, %v339
    %343 = vrot.lane.b32.xlu0 %v341, 32
    %v344 = vpop.permute.xlu0 %343
    %s346 = scalar_lea.vmem [#allocation3], 2
    %347 = vst.msk [vmem:[%s346] sm:$0x3] %vm243, %v344
    %v348 = vld [vmem:[#allocation2 + $0x4] sm:$0x3]
    %v349 = vadd.f32 %v348, %v298
    %v350 = vmul.f32 %v349, %v140
    %v351 = vtanh.pop %v350
    %v352 = vmul.f32 %v351, 0.5
    %v353 = vadd.f32 %v352, 0.5
    %v354 = vsel %vm139, %v351, %v353
    %v355 = vmul.f32 %v354, %v262
    %357 = vrot.lane.b32.xlu0 %v354, 64
    %v358 = vpop.permute.xlu0 %357
    %v360 = vmul.f32 %v354, %v358
    %362 = vrot.lane.b32.xlu0 %v360, 32
    %v363 = vpop.permute.xlu0 %362
    %v365 = vadd.f32 %v355, %v363
    %v366 = vtanh.pop %v365
    %368 = vrot.lane.b32.xlu0 %v366, 64
    %v369 = vpop.permute.xlu0 %368
    %v371 = vmul.f32 %v354, %v369
    %373 = vrot.lane.b32.xlu0 %v371, 32
    %v374 = vpop.permute.xlu0 %373
    %376 = vrot.lane.b32.xlu0 %v341, 64
    %v377 = vpop.permute.xlu0 %376
    %v379 = vsel %vm169, %v374, %v377
    %v381 = vsel %vm173, %v379, 0
    %383 = vmatpush.msra.mxu0 0.0
    %384 = vmatpush.msra.mxu0 0.0
    %385 = vmatpush.msra.mxu0 0.0
    %386 = vmatpush.msra.mxu0 0.0
    %387 = vmatpush.msra.mxu0 0.0
    %388 = vmatpush.msra.mxu0 0.0
    %389 = vmatpush.msra.mxu0 0.0
    %390 = vmatpush.msra.mxu0 0.0
    %391 = vmatpush.msra.mxu0 0.0
    %392 = vmatpush.msra.mxu0 0.0
    %393 = vmatpush.msra.mxu0 0.0
    %394 = vmatpush.msra.mxu0 0.0
    %395 = vmatpush.msra.mxu0 %v125
    %396 = vmatpush.msra.mxu0 %v124
    %397 = vmatpush.msra.mxu0 %v123
    %398 = vmatpush.msra.mxu0 %v122
    %399 = vmatmul.f32.gmra.mxu0 %v381
    %v400 = vpop.f32.mrf.mxu0
    %v401 = vadd.f32 %v171, %v400
    %402 = vdwg.mxu0
    %403 = vmatpush.msra.mxu0 0.0
    %404 = vmatpush.msra.mxu0 0.0
    %405 = vmatpush.msra.mxu0 0.0
    %406 = vmatpush.msra.mxu0 0.0
    %407 = vmatpush.msra.mxu0 0.0
    %408 = vmatpush.msra.mxu0 0.0
    %409 = vmatpush.msra.mxu0 0.0
    %410 = vmatpush.msra.mxu0 0.0
    %411 = vmatpush.msra.mxu0 %v133
    %412 = vmatpush.msra.mxu0 %v132
    %413 = vmatpush.msra.mxu0 %v131
    %414 = vmatpush.msra.mxu0 %v130
    %415 = vmatpush.msra.mxu0 %v129
    %416 = vmatpush.msra.mxu0 %v128
    %417 = vmatpush.msra.mxu0 %v127
    %418 = vmatpush.msra.mxu0 %v126
    %419 = vmatmul.f32.gmra.mxu0 %v381
    %v420 = vpop.f32.mrf.mxu0
    %v421 = vadd.f32 %v172, %v420
    %422 = vdwg.mxu0
    %v423 = vmul.f32 %v421, %v140
    %v424 = vtanh.pop %v423
    %v425 = vmul.f32 %v424, 0.5
    %v426 = vadd.f32 %v425, 0.5
    %v427 = vsel %vm139, %v424, %v426
    %v428 = vmul.f32 %v427, %v335
    %430 = vrot.lane.b32.xlu0 %v427, 64
    %v431 = vpop.permute.xlu0 %430
    %v433 = vmul.f32 %v427, %v431
    %435 = vrot.lane.b32.xlu0 %v433, 32
    %v436 = vpop.permute.xlu0 %435
    %v438 = vadd.f32 %v428, %v436
    %v439 = vtanh.pop %v438
    %441 = vrot.lane.b32.xlu0 %v439, 64
    %v442 = vpop.permute.xlu0 %441
    %v444 = vmul.f32 %v427, %v442
    %446 = vrot.lane.b32.xlu0 %v444, 32
    %v447 = vpop.permute.xlu0 %446
    %s449 = scalar_lea.vmem [#allocation3], 4
    %450 = vst.msk [vmem:[%s449] sm:$0x3] %vm243, %v447
    %v451 = vld [vmem:[#allocation2 + $0x6] sm:$0x3]
    %v452 = vadd.f32 %v451, %v401
    %v453 = vmul.f32 %v452, %v140
    %v454 = vtanh.pop %v453
    %v455 = vmul.f32 %v454, 0.5
    %v456 = vadd.f32 %v455, 0.5
    %v457 = vsel %vm139, %v454, %v456
    %v458 = vmul.f32 %v457, %v365
    %460 = vrot.lane.b32.xlu0 %v457, 64
    %v461 = vpop.permute.xlu0 %460
    %v463 = vmul.f32 %v457, %v461
    %465 = vrot.lane.b32.xlu0 %v463, 32
    %v466 = vpop.permute.xlu0 %465
    %v468 = vadd.f32 %v458, %v466
    %v469 = vtanh.pop %v468
    %471 = vrot.lane.b32.xlu0 %v469, 64
    %v472 = vpop.permute.xlu0 %471
    %v474 = vmul.f32 %v457, %v472
    %476 = vrot.lane.b32.xlu0 %v474, 32
    %v477 = vpop.permute.xlu0 %476
    %479 = vrot.lane.b32.xlu0 %v444, 64
    %v480 = vpop.permute.xlu0 %479
    %v482 = vsel %vm169, %v477, %v480
    %v484 = vsel %vm173, %v482, 0
    %486 = vmatpush.msra.mxu0 0.0
    %487 = vmatpush.msra.mxu0 0.0
    %488 = vmatpush.msra.mxu0 0.0
    %489 = vmatpush.msra.mxu0 0.0
    %490 = vmatpush.msra.mxu0 0.0
    %491 = vmatpush.msra.mxu0 0.0
    %492 = vmatpush.msra.mxu0 0.0
    %493 = vmatpush.msra.mxu0 0.0
    %494 = vmatpush.msra.mxu0 0.0
    %495 = vmatpush.msra.mxu0 0.0
    %496 = vmatpush.msra.mxu0 0.0
    %497 = vmatpush.msra.mxu0 0.0
    %498 = vmatpush.msra.mxu0 %v125
    %499 = vmatpush.msra.mxu0 %v124
    %500 = vmatpush.msra.mxu0 %v123
    %501 = vmatpush.msra.mxu0 %v122
    %502 = vmatmul.f32.gmra.mxu0 %v484
    %v503 = vpop.f32.mrf.mxu0
    %v504 = vadd.f32 %v171, %v503
    %505 = vdwg.mxu0
    %506 = vmatpush.msra.mxu0 0.0
    %507 = vmatpush.msra.mxu0 0.0
    %508 = vmatpush.msra.mxu0 0.0
    %509 = vmatpush.msra.mxu0 0.0
    %510 = vmatpush.msra.mxu0 0.0
    %511 = vmatpush.msra.mxu0 0.0
    %512 = vmatpush.msra.mxu0 0.0
    %513 = vmatpush.msra.mxu0 0.0
    %514 = vmatpush.msra.mxu0 %v133
    %515 = vmatpush.msra.mxu0 %v132
    %516 = vmatpush.msra.mxu0 %v131
    %517 = vmatpush.msra.mxu0 %v130
    %518 = vmatpush.msra.mxu0 %v129
    %519 = vmatpush.msra.mxu0 %v128
    %520 = vmatpush.msra.mxu0 %v127
    %521 = vmatpush.msra.mxu0 %v126
    %522 = vmatmul.f32.gmra.mxu0 %v484
    %v523 = vpop.f32.mrf.mxu0
    %v524 = vadd.f32 %v172, %v523
    %525 = vdwg.mxu0
    %v526 = vmul.f32 %v524, %v140
    %v527 = vtanh.pop %v526
    %v528 = vmul.f32 %v527, 0.5
    %v529 = vadd.f32 %v528, 0.5
    %v530 = vsel %vm139, %v527, %v529
    %v531 = vmul.f32 %v530, %v438
    %533 = vrot.lane.b32.xlu0 %v530, 64
    %v534 = vpop.permute.xlu0 %533
    %v536 = vmul.f32 %v530, %v534
    %538 = vrot.lane.b32.xlu0 %v536, 32
    %v539 = vpop.permute.xlu0 %538
    %v541 = vadd.f32 %v531, %v539
    %v542 = vtanh.pop %v541
    %544 = vrot.lane.b32.xlu0 %v542, 64
    %v545 = vpop.permute.xlu0 %544
    %v547 = vmul.f32 %v530, %v545
    %549 = vrot.lane.b32.xlu0 %v547, 32
    %v550 = vpop.permute.xlu0 %549
    %s552 = scalar_lea.vmem [#allocation3], 6
    %553 = vst.msk [vmem:[%s552] sm:$0x3] %vm243, %v550
    %v554 = vld [vmem:[#allocation2 + $0x8] sm:$0x3]
    %v555 = vadd.f32 %v554, %v504
    %v556 = vmul.f32 %v555, %v140
    %v557 = vtanh.pop %v556
    %v558 = vmul.f32 %v557, 0.5
    %v559 = vadd.f32 %v558, 0.5
    %v560 = vsel %vm139, %v557, %v559
    %v561 = vmul.f32 %v560, %v468
    %563 = vrot.lane.b32.xlu0 %v560, 64
    %v564 = vpop.permute.xlu0 %563
    %v566 = vmul.f32 %v560, %v564
    %568 = vrot.lane.b32.xlu0 %v566, 32
    %v569 = vpop.permute.xlu0 %568
    %v571 = vadd.f32 %v561, %v569
    %v572 = vtanh.pop %v571
    %574 = vrot.lane.b32.xlu0 %v572, 64
    %v575 = vpop.permute.xlu0 %574
    %v577 = vmul.f32 %v560, %v575
    %579 = vrot.lane.b32.xlu0 %v577, 32
    %v580 = vpop.permute.xlu0 %579
    %582 = vrot.lane.b32.xlu0 %v547, 64
    %v583 = vpop.permute.xlu0 %582
    %v585 = vsel %vm169, %v580, %v583
    %v587 = vsel %vm173, %v585, 0
    %589 = vmatpush.msra.mxu0 0.0
    %590 = vmatpush.msra.mxu0 0.0
    %591 = vmatpush.msra.mxu0 0.0
    %592 = vmatpush.msra.mxu0 0.0
    %593 = vmatpush.msra.mxu0 0.0
    %594 = vmatpush.msra.mxu0 0.0
    %595 = vmatpush.msra.mxu0 0.0
    %596 = vmatpush.msra.mxu0 0.0
    %597 = vmatpush.msra.mxu0 0.0
    %598 = vmatpush.msra.mxu0 0.0
    %599 = vmatpush.msra.mxu0 0.0
    %600 = vmatpush.msra.mxu0 0.0
    %601 = vmatpush.msra.mxu0 %v125
    %602 = vmatpush.msra.mxu0 %v124
    %603 = vmatpush.msra.mxu0 %v123
    %604 = vmatpush.msra.mxu0 %v122
    %605 = vmatmul.f32.gmra.mxu0 %v587
    %v606 = vpop.f32.mrf.mxu0
    %v607 = vadd.f32 %v171, %v606
    %608 = vdwg.mxu0
    %609 = vmatpush.msra.mxu0 0.0
    %610 = vmatpush.msra.mxu0 0.0
    %611 = vmatpush.msra.mxu0 0.0
    %612 = vmatpush.msra.mxu0 0.0
    %613 = vmatpush.msra.mxu0 0.0
    %614 = vmatpush.msra.mxu0 0.0
    %615 = vmatpush.msra.mxu0 0.0
    %616 = vmatpush.msra.mxu0 0.0
    %617 = vmatpush.msra.mxu0 %v133
    %618 = vmatpush.msra.mxu0 %v132
    %619 = vmatpush.msra.mxu0 %v131
    %620 = vmatpush.msra.mxu0 %v130
    %621 = vmatpush.msra.mxu0 %v129
    %622 = vmatpush.msra.mxu0 %v128
    %623 = vmatpush.msra.mxu0 %v127
    %624 = vmatpush.msra.mxu0 %v126
    %625 = vmatmul.f32.gmra.mxu0 %v587
    %v626 = vpop.f32.mrf.mxu0
    %v627 = vadd.f32 %v172, %v626
    %628 = vdwg.mxu0
    %v629 = vmul.f32 %v627, %v140
    %v630 = vtanh.pop %v629
    %v631 = vmul.f32 %v630, 0.5
    %v632 = vadd.f32 %v631, 0.5
    %v633 = vsel %vm139, %v630, %v632
    %v634 = vmul.f32 %v633, %v541
    %636 = vrot.lane.b32.xlu0 %v633, 64
    %v637 = vpop.permute.xlu0 %636
    %v639 = vmul.f32 %v633, %v637
    %641 = vrot.lane.b32.xlu0 %v639, 32
    %v642 = vpop.permute.xlu0 %641
    %v644 = vadd.f32 %v634, %v642
    %v645 = vtanh.pop %v644
    %647 = vrot.lane.b32.xlu0 %v645, 64
    %v648 = vpop.permute.xlu0 %647
    %v650 = vmul.f32 %v633, %v648
    %652 = vrot.lane.b32.xlu0 %v650, 32
    %v653 = vpop.permute.xlu0 %652
    %s655 = scalar_lea.vmem [#allocation3], 8
    %656 = vst.msk [vmem:[%s655] sm:$0x3] %vm243, %v653
    %v657 = vld [vmem:[#allocation2 + $0xa] sm:$0x3]
    %v658 = vadd.f32 %v657, %v607
    %v659 = vmul.f32 %v658, %v140
    %v660 = vtanh.pop %v659
    %v661 = vmul.f32 %v660, 0.5
    %v662 = vadd.f32 %v661, 0.5
    %v663 = vsel %vm139, %v660, %v662
    %v664 = vmul.f32 %v663, %v571
    %666 = vrot.lane.b32.xlu0 %v663, 64
    %v667 = vpop.permute.xlu0 %666
    %v669 = vmul.f32 %v663, %v667
    %671 = vrot.lane.b32.xlu0 %v669, 32
    %v672 = vpop.permute.xlu0 %671
    %v674 = vadd.f32 %v664, %v672
    %v675 = vtanh.pop %v674
    %677 = vrot.lane.b32.xlu0 %v675, 64
    %v678 = vpop.permute.xlu0 %677
    %v680 = vmul.f32 %v663, %v678
    %682 = vrot.lane.b32.xlu0 %v680, 32
    %v683 = vpop.permute.xlu0 %682
    %685 = vrot.lane.b32.xlu0 %v650, 64
    %v686 = vpop.permute.xlu0 %685
    %v688 = vsel %vm169, %v683, %v686
    %v690 = vsel %vm173, %v688, 0
    %692 = vmatpush.msra.mxu0 0.0
    %693 = vmatpush.msra.mxu0 0.0
    %694 = vmatpush.msra.mxu0 0.0
    %695 = vmatpush.msra.mxu0 0.0
    %696 = vmatpush.msra.mxu0 0.0
    %697 = vmatpush.msra.mxu0 0.0
    %698 = vmatpush.msra.mxu0 0.0
    %699 = vmatpush.msra.mxu0 0.0
    %700 = vmatpush.msra.mxu0 0.0
    %701 = vmatpush.msra.mxu0 0.0
    %702 = vmatpush.msra.mxu0 0.0
    %703 = vmatpush.msra.mxu0 0.0
    %704 = vmatpush.msra.mxu0 %v125
    %705 = vmatpush.msra.mxu0 %v124
    %706 = vmatpush.msra.mxu0 %v123
    %707 = vmatpush.msra.mxu0 %v122
    %708 = vmatmul.f32.gmra.mxu0 %v690
    %v709 = vpop.f32.mrf.mxu0
    %v710 = vadd.f32 %v171, %v709
    %711 = vdwg.mxu0
    %712 = vmatpush.msra.mxu0 0.0
    %713 = vmatpush.msra.mxu0 0.0
    %714 = vmatpush.msra.mxu0 0.0
    %715 = vmatpush.msra.mxu0 0.0
    %716 = vmatpush.msra.mxu0 0.0
    %717 = vmatpush.msra.mxu0 0.0
    %718 = vmatpush.msra.mxu0 0.0
    %719 = vmatpush.msra.mxu0 0.0
    %720 = vmatpush.msra.mxu0 %v133
    %721 = vmatpush.msra.mxu0 %v132
    %722 = vmatpush.msra.mxu0 %v131
    %723 = vmatpush.msra.mxu0 %v130
    %724 = vmatpush.msra.mxu0 %v129
    %725 = vmatpush.msra.mxu0 %v128
    %726 = vmatpush.msra.mxu0 %v127
    %727 = vmatpush.msra.mxu0 %v126
    %728 = vmatmul.f32.gmra.mxu0 %v690
    %v729 = vpop.f32.mrf.mxu0
    %v730 = vadd.f32 %v172, %v729
    %731 = vdwg.mxu0
    %v732 = vmul.f32 %v730, %v140
    %v733 = vtanh.pop %v732
    %v734 = vmul.f32 %v733, 0.5
    %v735 = vadd.f32 %v734, 0.5
    %v736 = vsel %vm139, %v733, %v735
    %v737 = vmul.f32 %v736, %v644
    %739 = vrot.lane.b32.xlu0 %v736, 64
    %v740 = vpop.permute.xlu0 %739
    %v742 = vmul.f32 %v736, %v740
    %744 = vrot.lane.b32.xlu0 %v742, 32
    %v745 = vpop.permute.xlu0 %744
    %v747 = vadd.f32 %v737, %v745
    %v748 = vtanh.pop %v747
    %750 = vrot.lane.b32.xlu0 %v748, 64
    %v751 = vpop.permute.xlu0 %750
    %v753 = vmul.f32 %v736, %v751
    %755 = vrot.lane.b32.xlu0 %v753, 32
    %v756 = vpop.permute.xlu0 %755
    %s758 = scalar_lea.vmem [#allocation3], 10
    %759 = vst.msk [vmem:[%s758] sm:$0x3] %vm243, %v756
    %v760 = vld [vmem:[#allocation2 + $0xc] sm:$0x3]
    %v761 = vadd.f32 %v760, %v710
    %v762 = vmul.f32 %v761, %v140
    %v763 = vtanh.pop %v762
    %v764 = vmul.f32 %v763, 0.5
    %v765 = vadd.f32 %v764, 0.5
    %v766 = vsel %vm139, %v763, %v765
    %v767 = vmul.f32 %v766, %v674
    %769 = vrot.lane.b32.xlu0 %v766, 64
    %v770 = vpop.permute.xlu0 %769
    %v772 = vmul.f32 %v766, %v770
    %774 = vrot.lane.b32.xlu0 %v772, 32
    %v775 = vpop.permute.xlu0 %774
    %v777 = vadd.f32 %v767, %v775
    %v778 = vtanh.pop %v777
    %780 = vrot.lane.b32.xlu0 %v778, 64
    %v781 = vpop.permute.xlu0 %780
    %v783 = vmul.f32 %v766, %v781
    %785 = vrot.lane.b32.xlu0 %v783, 32
    %v786 = vpop.permute.xlu0 %785
    %788 = vrot.lane.b32.xlu0 %v753, 64
    %v789 = vpop.permute.xlu0 %788
    %v791 = vsel %vm169, %v786, %v789
    %v793 = vsel %vm173, %v791, 0
    %795 = vmatpush.msra.mxu0 0.0
    %796 = vmatpush.msra.mxu0 0.0
    %797 = vmatpush.msra.mxu0 0.0
    %798 = vmatpush.msra.mxu0 0.0
    %799 = vmatpush.msra.mxu0 0.0
    %800 = vmatpush.msra.mxu0 0.0
    %801 = vmatpush.msra.mxu0 0.0
    %802 = vmatpush.msra.mxu0 0.0
    %803 = vmatpush.msra.mxu0 0.0
    %804 = vmatpush.msra.mxu0 0.0
    %805 = vmatpush.msra.mxu0 0.0
    %806 = vmatpush.msra.mxu0 0.0
    %807 = vmatpush.msra.mxu0 %v125
    %808 = vmatpush.msra.mxu0 %v124
    %809 = vmatpush.msra.mxu0 %v123
    %810 = vmatpush.msra.mxu0 %v122
    %811 = vmatmul.f32.gmra.mxu0 %v793
    %v812 = vpop.f32.mrf.mxu0
    %v813 = vadd.f32 %v171, %v812
    %814 = vdwg.mxu0
    %815 = vmatpush.msra.mxu0 0.0
    %816 = vmatpush.msra.mxu0 0.0
    %817 = vmatpush.msra.mxu0 0.0
    %818 = vmatpush.msra.mxu0 0.0
    %819 = vmatpush.msra.mxu0 0.0
    %820 = vmatpush.msra.mxu0 0.0
    %821 = vmatpush.msra.mxu0 0.0
    %822 = vmatpush.msra.mxu0 0.0
    %823 = vmatpush.msra.mxu0 %v133
    %824 = vmatpush.msra.mxu0 %v132
    %825 = vmatpush.msra.mxu0 %v131
    %826 = vmatpush.msra.mxu0 %v130
    %827 = vmatpush.msra.mxu0 %v129
    %828 = vmatpush.msra.mxu0 %v128
    %829 = vmatpush.msra.mxu0 %v127
    %830 = vmatpush.msra.mxu0 %v126
    %831 = vmatmul.f32.gmra.mxu0 %v793
    %v832 = vpop.f32.mrf.mxu0
    %v833 = vadd.f32 %v172, %v832
    %834 = vdwg.mxu0
    %v835 = vmul.f32 %v833, %v140
    %v836 = vtanh.pop %v835
    %v837 = vmul.f32 %v836, 0.5
    %v838 = vadd.f32 %v837, 0.5
    %v839 = vsel %vm139, %v836, %v838
    %v840 = vmul.f32 %v839, %v747
    %842 = vrot.lane.b32.xlu0 %v839, 64
    %v843 = vpop.permute.xlu0 %842
    %v845 = vmul.f32 %v839, %v843
    %847 = vrot.lane.b32.xlu0 %v845, 32
    %v848 = vpop.permute.xlu0 %847
    %v850 = vadd.f32 %v840, %v848
    %v851 = vtanh.pop %v850
    %853 = vrot.lane.b32.xlu0 %v851, 64
    %v854 = vpop.permute.xlu0 %853
    %v856 = vmul.f32 %v839, %v854
    %858 = vrot.lane.b32.xlu0 %v856, 32
    %v859 = vpop.permute.xlu0 %858
    %s861 = scalar_lea.vmem [#allocation3], 12
    %862 = vst.msk [vmem:[%s861] sm:$0x3] %vm243, %v859
    %v863 = vld [vmem:[#allocation2 + $0xe] sm:$0x3]
    %v864 = vadd.f32 %v863, %v813
    %v865 = vmul.f32 %v864, %v140
    %v866 = vtanh.pop %v865
    %v867 = vmul.f32 %v866, 0.5
    %v868 = vadd.f32 %v867, 0.5
    %v869 = vsel %vm139, %v866, %v868
    %v870 = vmul.f32 %v869, %v777
    %872 = vrot.lane.b32.xlu0 %v869, 64
    %v873 = vpop.permute.xlu0 %872
    %v875 = vmul.f32 %v869, %v873
    %877 = vrot.lane.b32.xlu0 %v875, 32
    %v878 = vpop.permute.xlu0 %877
    %v880 = vadd.f32 %v870, %v878
    %v881 = vtanh.pop %v880
    %883 = vrot.lane.b32.xlu0 %v881, 64
    %v884 = vpop.permute.xlu0 %883
    %v886 = vmul.f32 %v869, %v884
    %888 = vrot.lane.b32.xlu0 %v886, 32
    %v889 = vpop.permute.xlu0 %888
    %891 = vrot.lane.b32.xlu0 %v856, 64
    %v892 = vpop.permute.xlu0 %891
    %v894 = vsel %vm169, %v889, %v892
    %v896 = vsel %vm173, %v894, 0
    %898 = vmatpush.msra.mxu0 0.0
    %899 = vmatpush.msra.mxu0 0.0
    %900 = vmatpush.msra.mxu0 0.0
    %901 = vmatpush.msra.mxu0 0.0
    %902 = vmatpush.msra.mxu0 0.0
    %903 = vmatpush.msra.mxu0 0.0
    %904 = vmatpush.msra.mxu0 0.0
    %905 = vmatpush.msra.mxu0 0.0
    %906 = vmatpush.msra.mxu0 %v133
    %907 = vmatpush.msra.mxu0 %v132
    %908 = vmatpush.msra.mxu0 %v131
    %909 = vmatpush.msra.mxu0 %v130
    %910 = vmatpush.msra.mxu0 %v129
    %911 = vmatpush.msra.mxu0 %v128
    %912 = vmatpush.msra.mxu0 %v127
    %913 = vmatpush.msra.mxu0 %v126
    %914 = vmatmul.f32.gmra.mxu0 %v896
    %v915 = vpop.f32.mrf.mxu0
    %v916 = vadd.f32 %v172, %v915
    %917 = vdwg.mxu0
    %v918 = vmul.f32 %v916, %v140
    %v919 = vtanh.pop %v918
    %v920 = vmul.f32 %v919, 0.5
    %v921 = vadd.f32 %v920, 0.5
    %v922 = vsel %vm139, %v919, %v921
    %v923 = vmul.f32 %v922, %v850
    %925 = vrot.lane.b32.xlu0 %v922, 64
    %v926 = vpop.permute.xlu0 %925
    %v928 = vmul.f32 %v922, %v926
    %930 = vrot.lane.b32.xlu0 %v928, 32
    %v931 = vpop.permute.xlu0 %930
    %v933 = vadd.f32 %v923, %v931
    %v934 = vtanh.pop %v933
    %936 = vrot.lane.b32.xlu0 %v934, 64
    %v937 = vpop.permute.xlu0 %936
    %v939 = vmul.f32 %v922, %v937
    %941 = vrot.lane.b32.xlu0 %v939, 32
    %v942 = vpop.permute.xlu0 %941
    %s944 = scalar_lea.vmem [#allocation3], 14
    %945 = vst.msk [vmem:[%s944] sm:$0x3] %vm243, %v942
    %v946 = vld [vmem:[#allocation3] sm:$0x3]
    %v947 = vld [vmem:[#allocation3 + $0x2] sm:$0x3]
    %v948 = vld [vmem:[#allocation3 + $0x4] sm:$0x3]
    %v949 = vld [vmem:[#allocation3 + $0x6] sm:$0x3]
    %v950 = vld [vmem:[#allocation3 + $0x8] sm:$0x3]
    %v951 = vld [vmem:[#allocation3 + $0xa] sm:$0x3]
    %v952 = vld [vmem:[#allocation3 + $0xc] sm:$0x3]
    %v953 = vld [vmem:[#allocation3 + $0xe] sm:$0x3]
    %v954 = vld [vmem:[%s7] sm:$0x1]
    %v956 = vperm.slane %v954, 0
    %v958 = vmul.f32 %v946, %v956
    %v959 = vmul.f32 %v947, %v956
    %v960 = vmul.f32 %v948, %v956
    %v961 = vmul.f32 %v949, %v956
    %v962 = vmul.f32 %v950, %v956
    %v963 = vmul.f32 %v951, %v956
    %v964 = vmul.f32 %v952, %v956
    %v965 = vmul.f32 %v953, %v956
    %v966 = vsel %vm243, %v958, 0.0
    %967 = vadd.xlane.f32.xlu0 %v966
    %v968 = vpop.xlane.xlu0 %967
    %v969 = vsel %vm243, %v959, 0.0
    %970 = vadd.xlane.f32.xlu0 %v969
    %v971 = vpop.xlane.xlu0 %970
    %v972 = vsel %vm243, %v960, 0.0
    %973 = vadd.xlane.f32.xlu0 %v972
    %v974 = vpop.xlane.xlu0 %973
    %v975 = vsel %vm243, %v961, 0.0
    %976 = vadd.xlane.f32.xlu0 %v975
    %v977 = vpop.xlane.xlu0 %976
    %v978 = vsel %vm243, %v962, 0.0
    %979 = vadd.xlane.f32.xlu0 %v978
    %v980 = vpop.xlane.xlu0 %979
    %v981 = vsel %vm243, %v963, 0.0
    %982 = vadd.xlane.f32.xlu0 %v981
    %v983 = vpop.xlane.xlu0 %982
    %v984 = vsel %vm243, %v964, 0.0
    %985 = vadd.xlane.f32.xlu0 %v984
    %v986 = vpop.xlane.xlu0 %985
    %v987 = vsel %vm243, %v965, 0.0
    %988 = vadd.xlane.f32.xlu0 %v987
    %v989 = vpop.xlane.xlu0 %988
    %v990 = vld [vmem:[#allocation4] sm:$0x1]
    %v992 = vperm.slane %v990, 0
    %v994 = vadd.f32 %v968, %v992
    %v995 = vadd.f32 %v971, %v992
    %v996 = vadd.f32 %v974, %v992
    %v997 = vadd.f32 %v977, %v992
    %v998 = vadd.f32 %v980, %v992
    %v999 = vadd.f32 %v983, %v992
    %v1000 = vadd.f32 %v986, %v992
    %v1001 = vadd.f32 %v989, %v992
    %vm1002 = vcmask 1024
    %1003 = vst.msk [vmem:[%s9] sm:$0x3] %vm1002, %v994
    %1004 = vst.msk [vmem:[%s9 + $0x2] sm:$0x3] %vm1002, %v995
    %1005 = vst.msk [vmem:[%s9 + $0x4] sm:$0x3] %vm1002, %v996
    %1006 = vst.msk [vmem:[%s9 + $0x6] sm:$0x3] %vm1002, %v997
    %1007 = vst.msk [vmem:[%s9 + $0x8] sm:$0x3] %vm1002, %v998
    %1008 = vst.msk [vmem:[%s9 + $0xa] sm:$0x3] %vm1002, %v999
    %1009 = vst.msk [vmem:[%s9 + $0xc] sm:$0x3] %vm1002, %v1000
    %1010 = vst.msk [vmem:[%s9 + $0xe] sm:$0x3] %vm1002, %v1001
    // Predicated region
    $region50: #{lstm_forward.1} parent=1 // pred_check
      _
    $region51: #{lstm_forward.1} parent=1 // pred_check_branch
      %1012 = sbr.rel (0) target = $region53
    $region52: #{lstm_forward.1} parent=1 // pred_region
      _
    $region53: #{lstm_forward.1} parent=1 // pred_fallthru
      _
    // Predicated region
    $region54: #{lstm_forward.1} parent=1 // pred_check
      _
    $region55: #{lstm_forward.1} parent=1 // pred_check_branch
      %1014 = sbr.rel (0) target = $region57
    $region56: #{lstm_forward.1} parent=1 // pred_region
      _
    $region57: #{lstm_forward.1} parent=1 // pred_fallthru
      _
    %1015 = vsyncpa [#allocation6], 1
    %1016 = vsyncpa [#allocation8], 1

</llo_original>
